<compile_context>
chip_gen: v6e
topology: v6e:2x2x1
jax: 0.10.0
libtpu: 0.0.40
codegen_flags: <defaults>
</compile_context>

<pallas_src>
import functools

import jax
import jax.numpy as jnp
from jax.experimental import pallas as pl
from jax.experimental.pallas import tpu as pltpu


def _round_up(n: int, m: int) -> int:
    return (n + m - 1) // m * m


def _cdiv(n: int, m: int) -> int:
    return (n + m - 1) // m


def _classifier_kernel(x_ref, w1_ref, b1_ref, w2_ref, b2_ref, w3_ref, b3_ref,
                       o_ref):
    """One batch tile, feature-major layout (batch on the 128-lane axis).

    x_ref : (5, bt)   VMEM  input features (f32 or bf16), streamed per tile
    w*_ref: (out, in) VMEM  PyTorch nn.Linear weights, resident across steps
    b*_ref: (out, 1)  VMEM  biases, resident
    o_ref : (1, bt)   VMEM  lane-dense output row
    """
    x = x_ref[...].astype(jnp.float32)                              # (5, bt)

    # fc1 + ReLU : (5,5) @ (5,bt) -> (5,bt)   (MXU; VPU does bias + ReLU)
    h1 = jnp.dot(w1_ref[...], x,
                 precision=jax.lax.Precision.HIGHEST,
                 preferred_element_type=jnp.float32)
    h1 = jnp.maximum(h1 + b1_ref[...], 0.0)

    # fc2 + ReLU : (3,5) @ (5,bt) -> (3,bt)
    h2 = jnp.dot(w2_ref[...], h1,
                 precision=jax.lax.Precision.HIGHEST,
                 preferred_element_type=jnp.float32)
    h2 = jnp.maximum(h2 + b2_ref[...], 0.0)

    # fc3 : (1,3) @ (3,bt) -> (1,bt)
    z = jnp.dot(w3_ref[...], h2,
                precision=jax.lax.Precision.HIGHEST,
                preferred_element_type=jnp.float32) + b3_ref[...]

    # Exact sigmoid via one EUP tanh: sigmoid(z) = 0.5 * tanh(z/2) + 0.5.
    o_ref[...] = (0.5 * jnp.tanh(0.5 * z) + 0.5).astype(o_ref.dtype)


def _reference(x, params):
    """Pure-JAX reference matching the PyTorch module (weights are (out, in))."""
    h1 = jax.nn.relu(x @ params["w1"].T + params["b1"])
    h2 = jax.nn.relu(h1 @ params["w2"].T + params["b2"])
    return jax.nn.sigmoid(h2 @ params["w3"].T + params["b3"])


def classifier_forward(x, params, *, batch_tile=65536, feature_major=False,
                       xla_small_batch=2048):
    """Forward pass of the Classifier MLP.

    x: (B, 5) array (module layout), or (5, B) if feature_major=True
       (zero-copy fast path: no wrapper-side transpose of x).
    params: w1 (5,5), b1 (5,), w2 (3,5), b2 (3,), w3 (1,3), b3 (1,)
            in PyTorch (out_features, in_features) layout.
    Returns (B, 1) float32.
    """
    if feature_major:
        assert x.ndim == 2 and x.shape[0] == 5, x.shape
        B = x.shape[1]
    else:
        assert x.ndim == 2 and x.shape[1] == 5, x.shape
        B = x.shape[0]

    # Small batches: pallas_call launch + DMA setup dwarfs three tiny GEMVs;
    # let XLA fuse them instead (real threshold in production).
    if B <= xla_small_batch:
        xb = x.T if feature_major else x
        return _reference(jnp.asarray(xb, jnp.float32), params)

    # Stream bf16 inputs as-is (halves the dominant HBM read on v6e/v7x);
    # accumulate in f32 inside the kernel.  Everything else stays f32.
    in_dtype = jnp.bfloat16 if x.dtype == jnp.bfloat16 else jnp.float32

    # ---- batch tiling ----------------------------------------------------
    # Big tiles amortize the ~0.35us/step pipeline overhead; the step count is
    # balanced so ragged tails waste <128 lanes/step, and forced to >=2 steps
    # for large batches so both v7x TensorCores get work.
    b128 = _round_up(B, 128)
    bt = max(128, _round_up(min(int(batch_tile), b128), 128))
    n_steps = _cdiv(b128, bt)
    if n_steps == 1 and b128 > 2048:
        n_steps = 2
    bt = _round_up(_cdiv(b128, n_steps), 128)
    bp = bt * n_steps
    # Per-step VMEM: x tile 8*bt*4 (sublane-padded) + out tile 8*bt*4,
    # double-buffered -> 128*bt bytes (~8 MiB at bt=64K) -> fits all gens.

    # ---- wrapper-side data movement (kept minimal) -----------------------
    xt = jnp.asarray(x, in_dtype)
    if not feature_major:
        xt = xt.T                       # single fused cast+transpose pass
    if bp != B:
        # Tail padding only; folds into the producer copy under jit.
        xt = jnp.zeros((5, bp), in_dtype).at[:, :B].set(xt)

    f32 = jnp.float32
    w1 = jnp.asarray(params["w1"], f32)
    b1 = jnp.asarray(params["b1"], f32).reshape(5, 1)
    w2 = jnp.asarray(params["w2"], f32)
    b2 = jnp.asarray(params["b2"], f32).reshape(3, 1)
    w3 = jnp.asarray(params["w3"], f32)
    b3 = jnp.asarray(params["b3"], f32).reshape(1, 1)

    def resident(shape):                # whole tiny array, fetched once
        return pl.BlockSpec(shape, lambda i: (0, 0))

    yt = pl.pallas_call(
        _classifier_kernel,
        out_shape=jax.ShapeDtypeStruct((1, bp), jnp.float32),
        grid=(n_steps,),
        in_specs=[
            pl.BlockSpec((5, bt), lambda i: (0, i)),   # x: streamed per tile
            resident((5, 5)), resident((5, 1)),        # w1, b1
            resident((3, 5)), resident((3, 1)),        # w2, b2
            resident((1, 3)), resident((1, 1)),        # w3, b3
        ],
        out_specs=pl.BlockSpec((1, bt), lambda i: (0, i)),
        compiler_params=pltpu.CompilerParams(
            dimension_semantics=("parallel",),         # megacore on v7x
            vmem_limit_bytes=48 * 1024 * 1024,         # < v7x 64 MiB physical
        ),
    )(xt, w1, b1, w2, b2, w3, b3)

    # (1, B) lane-dense row -> module's (B, 1); same row-major data.
    return yt[:, :B].reshape(B, 1)


def init_params(key):
    """nn.Linear-style uniform(-1/sqrt(fan_in), +1/sqrt(fan_in)) init,
    weights kept in PyTorch (out_features, in_features) layout."""
    def linear(key, fan_in, fan_out):
        kw, kb = jax.random.split(key)
        bound = 1.0 / jnp.sqrt(jnp.float32(fan_in))
        w = jax.random.uniform(kw, (fan_out, fan_in), jnp.float32, -bound, bound)
        b = jax.random.uniform(kb, (fan_out,), jnp.float32, -bound, bound)
        return w, b

    k1, k2, k3 = jax.random.split(key, 3)
    w1, b1 = linear(k1, 5, 5)
    w2, b2 = linear(k2, 5, 3)
    w3, b3 = linear(k3, 3, 1)
    return {"w1": w1, "b1": b1, "w2": w2, "b2": b2, "w3": w3, "b3": b3}


if __name__ == "__main__":
    key = jax.random.PRNGKey(0)
    kx, kp = jax.random.split(key)
    params = init_params(kp)

    # jit so the cast/transpose/tail-pad prologue fuses; xla_small_batch=0
    # forces the Pallas path so the kernel is actually exercised here.
    fwd = jax.jit(functools.partial(classifier_forward, xla_small_batch=0))
    fwd_tiled = jax.jit(functools.partial(classifier_forward,
                                          batch_tile=1024, xla_small_batch=0))
    fwd_fm = jax.jit(functools.partial(classifier_forward, batch_tile=1024,
                                       feature_major=True, xla_small_batch=0))

    # 1) Small batch consistent with the module (single padded tile).
    B = 8
    x = jax.random.normal(kx, (B, 5), dtype=jnp.float32)
    out = jax.block_until_ready(fwd(x, params))
    ref = _reference(x, params)
    assert out.shape == (B, 1), out.shape
    assert jnp.allclose(out, ref, atol=5e-3, rtol=5e-3), (out, ref)

    # 2) Ragged larger batch: multi-step grid, tail padding, parallel steps.
    B2 = 3405
    x2 = jax.random.normal(kx, (B2, 5), dtype=jnp.float32)
    out2 = jax.block_until_ready(fwd_tiled(x2, params))
    ref2 = _reference(x2, params)
    assert out2.shape == (B2, 1), out2.shape
    assert jnp.allclose(out2, ref2, atol=5e-3, rtol=5e-3)

    # 3) Zero-copy feature-major fast path (producer already holds (5, B)).
    out3 = jax.block_until_ready(fwd_fm(x2.T, params))
    assert out3.shape == (B2, 1), out3.shape
    assert jnp.allclose(out3, ref2, atol=5e-3, rtol=5e-3)

    print("KERNEL_OK")
</pallas_src>

<mosaic_0001>
module attributes {stable_mosaic.version = 11 : i64} {
  func.func @_classifier_kernel(%arg0: i32, %arg1: memref<5x128xf32, #tpu.memory_space<vmem>>, %arg2: memref<5x5xf32, #tpu.memory_space<vmem>>, %arg3: memref<5x1xf32, #tpu.memory_space<vmem>>, %arg4: memref<3x5xf32, #tpu.memory_space<vmem>>, %arg5: memref<3x1xf32, #tpu.memory_space<vmem>>, %arg6: memref<1x3xf32, #tpu.memory_space<vmem>>, %arg7: memref<1x1xf32, #tpu.memory_space<vmem>>, %arg8: memref<1x128xf32, #tpu.memory_space<vmem>>) attributes {dimension_semantics = [#tpu.dimension_semantics<parallel>], iteration_bounds = array<i64: 1>, scalar_prefetch = 0 : i64, scratch_operands = 0 : i64, tpu.core_type = #tpu.core_type<tc>, window_params = [{transform_indices = @transform_0, window_bounds = array<i64: 5, 128>}, {pipeline_mode = #tpu.pipeline_mode<synchronous>, transform_indices = @transform_1, window_bounds = array<i64: 5, 5>}, {pipeline_mode = #tpu.pipeline_mode<synchronous>, transform_indices = @transform_2, window_bounds = array<i64: 5, 1>}, {pipeline_mode = #tpu.pipeline_mode<synchronous>, transform_indices = @transform_3, window_bounds = array<i64: 3, 5>}, {pipeline_mode = #tpu.pipeline_mode<synchronous>, transform_indices = @transform_4, window_bounds = array<i64: 3, 1>}, {pipeline_mode = #tpu.pipeline_mode<synchronous>, transform_indices = @transform_5, window_bounds = array<i64: 1, 3>}, {pipeline_mode = #tpu.pipeline_mode<synchronous>, transform_indices = @transform_6, window_bounds = array<i64: 1, 1>}, {transform_indices = @transform_7, window_bounds = array<i64: 1, 128>}]} {
    %c0 = arith.constant 0 : index
    %c0_0 = arith.constant 0 : index
    %0 = vector.load %arg1[%c0, %c0_0] : memref<5x128xf32, #tpu.memory_space<vmem>>, vector<5x128xf32>
    %c0_1 = arith.constant 0 : index
    %c0_2 = arith.constant 0 : index
    %1 = vector.load %arg2[%c0_1, %c0_2] : memref<5x5xf32, #tpu.memory_space<vmem>>, vector<5x5xf32>
    %cst = arith.constant dense<0.000000e+00> : vector<5x128xf32>
    %2 = tpu.matmul %1, %0, %cst {dimension_numbers = #tpu.dot_dimension_numbers<[1], [0], [0], [1], [0, 0, 1, 1], [], []>, precision = #tpu.contract_precision<fp32>} : vector<5x5xf32>, vector<5x128xf32>, vector<5x128xf32> -> vector<5x128xf32>
    %c0_3 = arith.constant 0 : index
    %c0_4 = arith.constant 0 : index
    %3 = vector.load %arg3[%c0_3, %c0_4] : memref<5x1xf32, #tpu.memory_space<vmem>>, vector<5x1xf32>
    %4 = vector.broadcast %3 : vector<5x1xf32> to vector<5x128xf32>
    %5 = arith.addf %2, %4 : vector<5x128xf32>
    %cst_5 = arith.constant 0.000000e+00 : f32
    %6 = vector.broadcast %cst_5 : f32 to vector<5x128xf32>
    %7 = arith.maximumf %5, %6 : vector<5x128xf32>
    %c0_6 = arith.constant 0 : index
    %c0_7 = arith.constant 0 : index
    %8 = vector.load %arg4[%c0_6, %c0_7] : memref<3x5xf32, #tpu.memory_space<vmem>>, vector<3x5xf32>
    %cst_8 = arith.constant dense<0.000000e+00> : vector<3x128xf32>
    %9 = tpu.matmul %8, %7, %cst_8 {dimension_numbers = #tpu.dot_dimension_numbers<[1], [0], [0], [1], [0, 0, 1, 1], [], []>, precision = #tpu.contract_precision<fp32>} : vector<3x5xf32>, vector<5x128xf32>, vector<3x128xf32> -> vector<3x128xf32>
    %c0_9 = arith.constant 0 : index
    %c0_10 = arith.constant 0 : index
    %10 = vector.load %arg5[%c0_9, %c0_10] : memref<3x1xf32, #tpu.memory_space<vmem>>, vector<3x1xf32>
    %11 = vector.broadcast %10 : vector<3x1xf32> to vector<3x128xf32>
    %12 = arith.addf %9, %11 : vector<3x128xf32>
    %cst_11 = arith.constant 0.000000e+00 : f32
    %13 = vector.broadcast %cst_11 : f32 to vector<3x128xf32>
    %14 = arith.maximumf %12, %13 : vector<3x128xf32>
    %c0_12 = arith.constant 0 : index
    %c0_13 = arith.constant 0 : index
    %15 = vector.load %arg6[%c0_12, %c0_13] : memref<1x3xf32, #tpu.memory_space<vmem>>, vector<1x3xf32>
    %cst_14 = arith.constant dense<0.000000e+00> : vector<1x128xf32>
    %16 = tpu.matmul %15, %14, %cst_14 {dimension_numbers = #tpu.dot_dimension_numbers<[1], [0], [0], [1], [0, 0, 1, 1], [], []>, precision = #tpu.contract_precision<fp32>} : vector<1x3xf32>, vector<3x128xf32>, vector<1x128xf32> -> vector<1x128xf32>
    %c0_15 = arith.constant 0 : index
    %c0_16 = arith.constant 0 : index
    %17 = vector.load %arg7[%c0_15, %c0_16] : memref<1x1xf32, #tpu.memory_space<vmem>>, vector<1x1xf32>
    %18 = vector.broadcast %17 : vector<1x1xf32> to vector<1x128xf32>
    %19 = arith.addf %16, %18 : vector<1x128xf32>
    %cst_17 = arith.constant 5.000000e-01 : f32
    %20 = vector.broadcast %cst_17 : f32 to vector<1x128xf32>
    %21 = arith.mulf %20, %19 : vector<1x128xf32>
    %22 = math.tanh %21 : vector<1x128xf32>
    %cst_18 = arith.constant 5.000000e-01 : f32
    %23 = vector.broadcast %cst_18 : f32 to vector<1x128xf32>
    %24 = arith.mulf %23, %22 : vector<1x128xf32>
    %cst_19 = arith.constant 5.000000e-01 : f32
    %25 = vector.broadcast %cst_19 : f32 to vector<1x128xf32>
    %26 = arith.addf %24, %25 : vector<1x128xf32>
    %c0_20 = arith.constant 0 : index
    %c0_21 = arith.constant 0 : index
    %27 = vector.load %arg8[%c0_20, %c0_21] : memref<1x128xf32, #tpu.memory_space<vmem>>, vector<1x128xf32>
    tpu.vector_store %arg8[%c0_20, %c0_21], %26 {strides = array<i32>} : memref<1x128xf32, #tpu.memory_space<vmem>>, vector<1x128xf32>,
    return
  }
  func.func @transform_0(%arg0: i32) -> (i32, i32) {
    %c0_i32 = arith.constant 0 : i32
    %c0_i32_0 = arith.constant 0 : i32
    return %c0_i32, %arg0 : i32, i32
  }
  func.func @transform_1(%arg0: i32) -> (i32, i32) {
    %c0_i32 = arith.constant 0 : i32
    %c0_i32_0 = arith.constant 0 : i32
    %c0_i32_1 = arith.constant 0 : i32
    return %c0_i32, %c0_i32_0 : i32, i32
  }
  func.func @transform_2(%arg0: i32) -> (i32, i32) {
    %c0_i32 = arith.constant 0 : i32
    %c0_i32_0 = arith.constant 0 : i32
    %c0_i32_1 = arith.constant 0 : i32
    return %c0_i32, %c0_i32_0 : i32, i32
  }
  func.func @transform_3(%arg0: i32) -> (i32, i32) {
    %c0_i32 = arith.constant 0 : i32
    %c0_i32_0 = arith.constant 0 : i32
    %c0_i32_1 = arith.constant 0 : i32
    return %c0_i32, %c0_i32_0 : i32, i32
  }
  func.func @transform_4(%arg0: i32) -> (i32, i32) {
    %c0_i32 = arith.constant 0 : i32
    %c0_i32_0 = arith.constant 0 : i32
    %c0_i32_1 = arith.constant 0 : i32
    return %c0_i32, %c0_i32_0 : i32, i32
  }
  func.func @transform_5(%arg0: i32) -> (i32, i32) {
    %c0_i32 = arith.constant 0 : i32
    %c0_i32_0 = arith.constant 0 : i32
    %c0_i32_1 = arith.constant 0 : i32
    return %c0_i32, %c0_i32_0 : i32, i32
  }
  func.func @transform_6(%arg0: i32) -> (i32, i32) {
    %c0_i32 = arith.constant 0 : i32
    %c0_i32_0 = arith.constant 0 : i32
    %c0_i32_1 = arith.constant 0 : i32
    return %c0_i32, %c0_i32_0 : i32, i32
  }
  func.func @transform_7(%arg0: i32) -> (i32, i32) {
    %c0_i32 = arith.constant 0 : i32
    %c0_i32_0 = arith.constant 0 : i32
    return %c0_i32, %arg0 : i32, i32
  }
}

</mosaic_0001>

<llo_original>
// kernel: classifier_forward.1
$region0: #{classifier_forward.1}
  #allocation0 [shape = 'u32[]', space=smem, size = 0x4, offset = 0x4, fixed_abs, tag = 'smem constant byte address 0x4 - core index']
  #allocation1 [shape = 'u32[144,128]{1,0:T(1,128)}', space=vmem, size = 0x12000, scoped, tag = 'internal scratch']
  #allocation2 [shape = 'f32[1,1]{1,0:T(1,128)S(1)}', space=vmem, size = 0x200, scoped, tag = 'scoped memory for classifier_forward.1']
  %s0 = inlined_call_operand.vmem [shape: f32[5,128], index: 0, kind: input, shape index: {}]
  %s1 = inlined_call_operand.vmem [shape: f32[5,5], index: 1, kind: input, shape index: {}]
  %s2 = inlined_call_operand.vmem [shape: f32[5,1], index: 2, kind: input, shape index: {}]
  %s3 = inlined_call_operand.vmem [shape: f32[3,5], index: 3, kind: input, shape index: {}]
  %s4 = inlined_call_operand.vmem [shape: f32[3,1], index: 4, kind: input, shape index: {}]
  %s5 = inlined_call_operand.vmem [shape: f32[1,3], index: 5, kind: input, shape index: {}]
  %s6 = inlined_call_operand.<no memory space> [shape: f32[1,1], index: 6, kind: input, shape index: {}]
  %s7 = inlined_call_operand.vmem [shape: f32[1,128], index: 7, kind: output, shape index: {}]
  %s8 = sld [smem:[#allocation0]]
  $region38: #{classifier_forward.1} parent=0
    _
  %s10 = ssub.s32 1, %s8
  %s11 = scalar_select 0, %s10, %s8
  %v12 = vstv %s6
  %13 = vst [vmem:[#allocation2] sm:$0x1] %v12
  // Predicated region
  $region2: #{classifier_forward.1} parent=0 // pred_check
    _
  $region3: #{classifier_forward.1} parent=0 // pred_check_branch
    %15 = sbr.rel (0) target = $region5
  $region4: #{classifier_forward.1} parent=0 // pred_region
    _
  $region5: #{classifier_forward.1} parent=0 // pred_fallthru
    _
  // Predicated region
  $region6: #{classifier_forward.1} parent=0 // pred_check
    _
  $region7: #{classifier_forward.1} parent=0 // pred_check_branch
    %17 = sbr.rel (0) target = $region9
  $region8: #{classifier_forward.1} parent=0 // pred_region
    _
  $region9: #{classifier_forward.1} parent=0 // pred_fallthru
    _
  // Predicated region
  $region10: #{classifier_forward.1} parent=0 // pred_check
    _
  $region11: #{classifier_forward.1} parent=0 // pred_check_branch
    %19 = sbr.rel (0) target = $region13
  $region12: #{classifier_forward.1} parent=0 // pred_region
    _
  $region13: #{classifier_forward.1} parent=0 // pred_fallthru
    _
  // Predicated region
  $region14: #{classifier_forward.1} parent=0 // pred_check
    _
  $region15: #{classifier_forward.1} parent=0 // pred_check_branch
    %21 = sbr.rel (0) target = $region17
  $region16: #{classifier_forward.1} parent=0 // pred_region
    _
  $region17: #{classifier_forward.1} parent=0 // pred_fallthru
    _
  // Predicated region
  $region18: #{classifier_forward.1} parent=0 // pred_check
    _
  $region19: #{classifier_forward.1} parent=0 // pred_check_branch
    %23 = sbr.rel (0) target = $region21
  $region20: #{classifier_forward.1} parent=0 // pred_region
    _
  $region21: #{classifier_forward.1} parent=0 // pred_fallthru
    _
  // Predicated region
  $region22: #{classifier_forward.1} parent=0 // pred_check
    _
  $region23: #{classifier_forward.1} parent=0 // pred_check_branch
    %25 = sbr.rel (0) target = $region25
  $region24: #{classifier_forward.1} parent=0 // pred_region
    _
  $region25: #{classifier_forward.1} parent=0 // pred_fallthru
    _
  // Predicated region
  $region26: #{classifier_forward.1} parent=0 // pred_check
    _
  $region27: #{classifier_forward.1} parent=0 // pred_check_branch
    %27 = sbr.rel (0) target = $region29
  $region28: #{classifier_forward.1} parent=0 // pred_region
    _
  $region29: #{classifier_forward.1} parent=0 // pred_fallthru
    _
  %v28 = vld [vmem:[%s0] sm:$0x1f]
  %v29 = vld [vmem:[%s1] sm:$0x1f]
  %v30 = vld [vmem:[%s2] sm:$0x1f]
  %32 = vset.pattern.permute.xlu0 0
  %33 = vperm.xlu0 %32, %v30
  %v34 = vpop.permute.xlu0 %33
  %vm36 = vcmask 39936
  %v38 = vsel %vm36, %v29, 0
  %vm40 = vcmask 1044480
  %v42 = vsel %vm40, %v28, 0
  %44 = vmatprep.subr.mxu0 0.0
  %45 = vmatpush1.msra.mxu0 0.0
  %46 = vmatprep.subr.mxu0 0.0
  %47 = vmatpush1.msra.mxu0 0.0
  %48 = vmatprep.subr.mxu0 0.0
  %49 = vmatpush1.msra.mxu0 0.0
  %50 = vmatprep.subr.mxu0 0.0
  %51 = vmatpush1.msra.mxu0 0.0
  %52 = vmatprep.subr.mxu0 0.0
  %53 = vmatpush1.msra.mxu0 0.0
  %54 = vmatprep.subr.mxu0 0.0
  %55 = vmatpush1.msra.mxu0 0.0
  %56 = vmatprep.subr.mxu0 0.0
  %57 = vmatpush1.msra.mxu0 0.0
  %58 = vmatprep.subr.mxu0 0.0
  %59 = vmatpush1.msra.mxu0 0.0
  %60 = vmatprep.subr.mxu0 0.0
  %61 = vmatpush1.msra.mxu0 0.0
  %62 = vmatprep.subr.mxu0 0.0
  %63 = vmatpush1.msra.mxu0 0.0
  %64 = vmatprep.subr.mxu0 0.0
  %65 = vmatpush1.msra.mxu0 0.0
  %66 = vmatprep.subr.mxu0 0.0
  %67 = vmatpush1.msra.mxu0 0.0
  %68 = vmatprep.subr.mxu0 0.0
  %69 = vmatpush1.msra.mxu0 0.0
  %70 = vmatprep.subr.mxu0 0.0
  %71 = vmatpush1.msra.mxu0 0.0
  %72 = vmatprep.subr.mxu0 0.0
  %73 = vmatpush1.msra.mxu0 0.0
  %74 = vmatprep.subr.mxu0 0.0
  %v75 = vand.u32 %v42, 4294901760
  %76 = vmatpush1.msra.mxu0 %v75
  %77 = vmatprep.subr.mxu0 0.0
  %78 = vmatpush2.msra.mxu0 0.0
  %79 = vmatprep.subr.mxu0 0.0
  %80 = vmatpush2.msra.mxu0 0.0
  %81 = vmatprep.subr.mxu0 0.0
  %82 = vmatpush2.msra.mxu0 0.0
  %83 = vmatprep.subr.mxu0 0.0
  %84 = vmatpush2.msra.mxu0 0.0
  %85 = vmatprep.subr.mxu0 0.0
  %86 = vmatpush2.msra.mxu0 0.0
  %87 = vmatprep.subr.mxu0 0.0
  %88 = vmatpush2.msra.mxu0 0.0
  %89 = vmatprep.subr.mxu0 0.0
  %90 = vmatpush2.msra.mxu0 0.0
  %91 = vmatprep.subr.mxu0 0.0
  %92 = vmatpush2.msra.mxu0 0.0
  %93 = vmatprep.subr.mxu0 0.0
  %94 = vmatpush2.msra.mxu0 0.0
  %95 = vmatprep.subr.mxu0 0.0
  %96 = vmatpush2.msra.mxu0 0.0
  %97 = vmatprep.subr.mxu0 0.0
  %98 = vmatpush2.msra.mxu0 0.0
  %99 = vmatprep.subr.mxu0 0.0
  %100 = vmatpush2.msra.mxu0 0.0
  %101 = vmatprep.subr.mxu0 0.0
  %102 = vmatpush2.msra.mxu0 0.0
  %103 = vmatprep.subr.mxu0 0.0
  %104 = vmatpush2.msra.mxu0 0.0
  %105 = vmatprep.subr.mxu0 0.0
  %106 = vmatpush2.msra.mxu0 0.0
  %107 = vmatprep.subr.mxu0 0.0
  %108 = vmatpush2.msra.mxu0 0.0
  %109 = vmatprep.mubr.f32.mxu0 0.0
  %v110 = vand.u32 %v38, 4294901760
  %v111 = vsub.f32 %v38, %v110
  %v112 = vand.u32 %v111, 4294901760
  %v113 = vsub.f32 %v111, %v112
  %v114 = vand.u32 %v113, 4294901760
  %115 = vmatmul.mubr.f32.gmra.mxu0 %v114
  %v116 = vpop.f32.mrf.mxu0
  %v117 = vadd.f32 %v34, %v116
  %v118 = vpop.f32.mrf.mxu0
  %119 = vdwg.mxu0
  %120 = vmatprep.subr.mxu0 0.0
  %121 = vmatpush1.msra.mxu0 0.0
  %122 = vmatprep.subr.mxu0 0.0
  %123 = vmatpush1.msra.mxu0 0.0
  %124 = vmatprep.subr.mxu0 0.0
  %125 = vmatpush1.msra.mxu0 0.0
  %126 = vmatprep.subr.mxu0 0.0
  %127 = vmatpush1.msra.mxu0 0.0
  %128 = vmatprep.subr.mxu0 0.0
  %129 = vmatpush1.msra.mxu0 0.0
  %130 = vmatprep.subr.mxu0 0.0
  %131 = vmatpush1.msra.mxu0 0.0
  %132 = vmatprep.subr.mxu0 0.0
  %133 = vmatpush1.msra.mxu0 0.0
  %134 = vmatprep.subr.mxu0 0.0
  %135 = vmatpush1.msra.mxu0 0.0
  %136 = vmatprep.subr.mxu0 0.0
  %137 = vmatpush1.msra.mxu0 0.0
  %138 = vmatprep.subr.mxu0 0.0
  %139 = vmatpush1.msra.mxu0 0.0
  %140 = vmatprep.subr.mxu0 0.0
  %141 = vmatpush1.msra.mxu0 0.0
  %142 = vmatprep.subr.mxu0 0.0
  %143 = vmatpush1.msra.mxu0 0.0
  %144 = vmatprep.subr.mxu0 0.0
  %145 = vmatpush1.msra.mxu0 0.0
  %146 = vmatprep.subr.mxu0 0.0
  %147 = vmatpush1.msra.mxu0 0.0
  %148 = vmatprep.subr.mxu0 0.0
  %149 = vmatpush1.msra.mxu0 0.0
  %150 = vmatprep.subr.mxu0 0.0
  %v151 = vand.u32 %v42, 4294901760
  %v152 = vsub.f32 %v42, %v151
  %v153 = vand.u32 %v152, 4294901760
  %v154 = vsub.f32 %v152, %v153
  %v155 = vand.u32 %v154, 4294901760
  %156 = vmatpush1.msra.mxu0 %v155
  %157 = vmatprep.subr.mxu0 0.0
  %158 = vmatpush2.msra.mxu0 0.0
  %159 = vmatprep.subr.mxu0 0.0
  %160 = vmatpush2.msra.mxu0 0.0
  %161 = vmatprep.subr.mxu0 0.0
  %162 = vmatpush2.msra.mxu0 0.0
  %163 = vmatprep.subr.mxu0 0.0
  %164 = vmatpush2.msra.mxu0 0.0
  %165 = vmatprep.subr.mxu0 0.0
  %166 = vmatpush2.msra.mxu0 0.0
  %167 = vmatprep.subr.mxu0 0.0
  %168 = vmatpush2.msra.mxu0 0.0
  %169 = vmatprep.subr.mxu0 0.0
  %170 = vmatpush2.msra.mxu0 0.0
  %171 = vmatprep.subr.mxu0 0.0
  %172 = vmatpush2.msra.mxu0 0.0
  %173 = vmatprep.subr.mxu0 0.0
  %174 = vmatpush2.msra.mxu0 0.0
  %175 = vmatprep.subr.mxu0 0.0
  %176 = vmatpush2.msra.mxu0 0.0
  %177 = vmatprep.subr.mxu0 0.0
  %178 = vmatpush2.msra.mxu0 0.0
  %179 = vmatprep.subr.mxu0 0.0
  %180 = vmatpush2.msra.mxu0 0.0
  %181 = vmatprep.subr.mxu0 0.0
  %182 = vmatpush2.msra.mxu0 0.0
  %183 = vmatprep.subr.mxu0 0.0
  %184 = vmatpush2.msra.mxu0 0.0
  %185 = vmatprep.subr.mxu0 0.0
  %186 = vmatpush2.msra.mxu0 0.0
  %187 = vmatprep.subr.mxu0 0.0
  %188 = vmatpush2.msra.mxu0 0.0
  %189 = vmatprep.mubr.f32.mxu0 0.0
  %v190 = vand.u32 %v38, 4294901760
  %191 = vmatmul.mubr.f32.gmra.mxu0 %v190
  %v192 = vpop.f32.mrf.mxu0
  %v193 = vadd.f32 %v117, %v192
  %v194 = vpop.f32.mrf.mxu0
  %195 = vdwg.mxu0
  %196 = vmatprep.subr.mxu0 0.0
  %197 = vmatpush1.msra.mxu0 0.0
  %198 = vmatprep.subr.mxu0 0.0
  %199 = vmatpush1.msra.mxu0 0.0
  %200 = vmatprep.subr.mxu0 0.0
  %201 = vmatpush1.msra.mxu0 0.0
  %202 = vmatprep.subr.mxu0 0.0
  %203 = vmatpush1.msra.mxu0 0.0
  %204 = vmatprep.subr.mxu0 0.0
  %205 = vmatpush1.msra.mxu0 0.0
  %206 = vmatprep.subr.mxu0 0.0
  %207 = vmatpush1.msra.mxu0 0.0
  %208 = vmatprep.subr.mxu0 0.0
  %209 = vmatpush1.msra.mxu0 0.0
  %210 = vmatprep.subr.mxu0 0.0
  %211 = vmatpush1.msra.mxu0 0.0
  %212 = vmatprep.subr.mxu0 0.0
  %213 = vmatpush1.msra.mxu0 0.0
  %214 = vmatprep.subr.mxu0 0.0
  %215 = vmatpush1.msra.mxu0 0.0
  %216 = vmatprep.subr.mxu0 0.0
  %217 = vmatpush1.msra.mxu0 0.0
  %218 = vmatprep.subr.mxu0 0.0
  %219 = vmatpush1.msra.mxu0 0.0
  %220 = vmatprep.subr.mxu0 0.0
  %221 = vmatpush1.msra.mxu0 0.0
  %222 = vmatprep.subr.mxu0 0.0
  %223 = vmatpush1.msra.mxu0 0.0
  %224 = vmatprep.subr.mxu0 0.0
  %225 = vmatpush1.msra.mxu0 0.0
  %226 = vmatprep.subr.mxu0 0.0
  %v227 = vand.u32 %v42, 4294901760
  %v228 = vsub.f32 %v42, %v227
  %229 = vmatpush1.msra.mxu0 %v228
  %230 = vmatprep.subr.mxu0 0.0
  %231 = vmatpush2.msra.mxu0 0.0
  %232 = vmatprep.subr.mxu0 0.0
  %233 = vmatpush2.msra.mxu0 0.0
  %234 = vmatprep.subr.mxu0 0.0
  %235 = vmatpush2.msra.mxu0 0.0
  %236 = vmatprep.subr.mxu0 0.0
  %237 = vmatpush2.msra.mxu0 0.0
  %238 = vmatprep.subr.mxu0 0.0
  %239 = vmatpush2.msra.mxu0 0.0
  %240 = vmatprep.subr.mxu0 0.0
  %241 = vmatpush2.msra.mxu0 0.0
  %242 = vmatprep.subr.mxu0 0.0
  %243 = vmatpush2.msra.mxu0 0.0
  %244 = vmatprep.subr.mxu0 0.0
  %245 = vmatpush2.msra.mxu0 0.0
  %246 = vmatprep.subr.mxu0 0.0
  %247 = vmatpush2.msra.mxu0 0.0
  %248 = vmatprep.subr.mxu0 0.0
  %249 = vmatpush2.msra.mxu0 0.0
  %250 = vmatprep.subr.mxu0 0.0
  %251 = vmatpush2.msra.mxu0 0.0
  %252 = vmatprep.subr.mxu0 0.0
  %253 = vmatpush2.msra.mxu0 0.0
  %254 = vmatprep.subr.mxu0 0.0
  %255 = vmatpush2.msra.mxu0 0.0
  %256 = vmatprep.subr.mxu0 0.0
  %257 = vmatpush2.msra.mxu0 0.0
  %258 = vmatprep.subr.mxu0 0.0
  %259 = vmatpush2.msra.mxu0 0.0
  %260 = vmatprep.subr.mxu0 0.0
  %261 = vmatpush2.msra.mxu0 0.0
  %262 = vmatprep.mubr.f32.mxu0 0.0
  %v263 = vand.u32 %v38, 4294901760
  %v264 = vsub.f32 %v38, %v263
  %265 = vmatmul.mubr.f32.gmra.mxu0 %v264
  %v266 = vpop.f32.mrf.mxu0
  %v267 = vadd.f32 %v193, %v266
  %v268 = vpop.f32.mrf.mxu0
  %269 = vdwg.mxu0
  %270 = vmatprep.subr.mxu0 0.0
  %271 = vmatpush1.msra.mxu0 0.0
  %272 = vmatprep.subr.mxu0 0.0
  %273 = vmatpush1.msra.mxu0 0.0
  %274 = vmatprep.subr.mxu0 0.0
  %275 = vmatpush1.msra.mxu0 0.0
  %276 = vmatprep.subr.mxu0 0.0
  %277 = vmatpush1.msra.mxu0 0.0
  %278 = vmatprep.subr.mxu0 0.0
  %279 = vmatpush1.msra.mxu0 0.0
  %280 = vmatprep.subr.mxu0 0.0
  %281 = vmatpush1.msra.mxu0 0.0
  %282 = vmatprep.subr.mxu0 0.0
  %283 = vmatpush1.msra.mxu0 0.0
  %284 = vmatprep.subr.mxu0 0.0
  %285 = vmatpush1.msra.mxu0 0.0
  %286 = vmatprep.subr.mxu0 0.0
  %287 = vmatpush1.msra.mxu0 0.0
  %288 = vmatprep.subr.mxu0 0.0
  %289 = vmatpush1.msra.mxu0 0.0
  %290 = vmatprep.subr.mxu0 0.0
  %291 = vmatpush1.msra.mxu0 0.0
  %292 = vmatprep.subr.mxu0 0.0
  %293 = vmatpush1.msra.mxu0 0.0
  %294 = vmatprep.subr.mxu0 0.0
  %295 = vmatpush1.msra.mxu0 0.0
  %296 = vmatprep.subr.mxu0 0.0
  %297 = vmatpush1.msra.mxu0 0.0
  %298 = vmatprep.subr.mxu0 0.0
  %299 = vmatpush1.msra.mxu0 0.0
  %300 = vmatprep.subr.mxu0 0.0
  %v301 = vand.u32 %v42, 4294901760
  %302 = vmatpush1.msra.mxu0 %v301
  %303 = vmatprep.subr.mxu0 0.0
  %304 = vmatpush2.msra.mxu0 0.0
  %305 = vmatprep.subr.mxu0 0.0
  %306 = vmatpush2.msra.mxu0 0.0
  %307 = vmatprep.subr.mxu0 0.0
  %308 = vmatpush2.msra.mxu0 0.0
  %309 = vmatprep.subr.mxu0 0.0
  %310 = vmatpush2.msra.mxu0 0.0
  %311 = vmatprep.subr.mxu0 0.0
  %312 = vmatpush2.msra.mxu0 0.0
  %313 = vmatprep.subr.mxu0 0.0
  %314 = vmatpush2.msra.mxu0 0.0
  %315 = vmatprep.subr.mxu0 0.0
  %316 = vmatpush2.msra.mxu0 0.0
  %317 = vmatprep.subr.mxu0 0.0
  %318 = vmatpush2.msra.mxu0 0.0
  %319 = vmatprep.subr.mxu0 0.0
  %320 = vmatpush2.msra.mxu0 0.0
  %321 = vmatprep.subr.mxu0 0.0
  %322 = vmatpush2.msra.mxu0 0.0
  %323 = vmatprep.subr.mxu0 0.0
  %324 = vmatpush2.msra.mxu0 0.0
  %325 = vmatprep.subr.mxu0 0.0
  %326 = vmatpush2.msra.mxu0 0.0
  %327 = vmatprep.subr.mxu0 0.0
  %328 = vmatpush2.msra.mxu0 0.0
  %329 = vmatprep.subr.mxu0 0.0
  %330 = vmatpush2.msra.mxu0 0.0
  %331 = vmatprep.subr.mxu0 0.0
  %332 = vmatpush2.msra.mxu0 0.0
  %333 = vmatprep.subr.mxu0 0.0
  %334 = vmatpush2.msra.mxu0 0.0
  %335 = vmatprep.mubr.f32.mxu0 0.0
  %v336 = vand.u32 %v38, 4294901760
  %v337 = vsub.f32 %v38, %v336
  %v338 = vand.u32 %v337, 4294901760
  %339 = vmatmul.mubr.f32.gmra.mxu0 %v338
  %v340 = vpop.f32.mrf.mxu0
  %v341 = vadd.f32 %v267, %v340
  %v342 = vpop.f32.mrf.mxu0
  %343 = vdwg.mxu0
  %344 = vmatprep.subr.mxu0 0.0
  %345 = vmatpush1.msra.mxu0 0.0
  %346 = vmatprep.subr.mxu0 0.0
  %347 = vmatpush1.msra.mxu0 0.0
  %348 = vmatprep.subr.mxu0 0.0
  %349 = vmatpush1.msra.mxu0 0.0
  %350 = vmatprep.subr.mxu0 0.0
  %351 = vmatpush1.msra.mxu0 0.0
  %352 = vmatprep.subr.mxu0 0.0
  %353 = vmatpush1.msra.mxu0 0.0
  %354 = vmatprep.subr.mxu0 0.0
  %355 = vmatpush1.msra.mxu0 0.0
  %356 = vmatprep.subr.mxu0 0.0
  %357 = vmatpush1.msra.mxu0 0.0
  %358 = vmatprep.subr.mxu0 0.0
  %359 = vmatpush1.msra.mxu0 0.0
  %360 = vmatprep.subr.mxu0 0.0
  %361 = vmatpush1.msra.mxu0 0.0
  %362 = vmatprep.subr.mxu0 0.0
  %363 = vmatpush1.msra.mxu0 0.0
  %364 = vmatprep.subr.mxu0 0.0
  %365 = vmatpush1.msra.mxu0 0.0
  %366 = vmatprep.subr.mxu0 0.0
  %367 = vmatpush1.msra.mxu0 0.0
  %368 = vmatprep.subr.mxu0 0.0
  %369 = vmatpush1.msra.mxu0 0.0
  %370 = vmatprep.subr.mxu0 0.0
  %371 = vmatpush1.msra.mxu0 0.0
  %372 = vmatprep.subr.mxu0 0.0
  %373 = vmatpush1.msra.mxu0 0.0
  %374 = vmatprep.subr.mxu0 0.0
  %v375 = vand.u32 %v42, 4294901760
  %v376 = vsub.f32 %v42, %v375
  %v377 = vand.u32 %v376, 4294901760
  %378 = vmatpush1.msra.mxu0 %v377
  %379 = vmatprep.subr.mxu0 0.0
  %380 = vmatpush2.msra.mxu0 0.0
  %381 = vmatprep.subr.mxu0 0.0
  %382 = vmatpush2.msra.mxu0 0.0
  %383 = vmatprep.subr.mxu0 0.0
  %384 = vmatpush2.msra.mxu0 0.0
  %385 = vmatprep.subr.mxu0 0.0
  %386 = vmatpush2.msra.mxu0 0.0
  %387 = vmatprep.subr.mxu0 0.0
  %388 = vmatpush2.msra.mxu0 0.0
  %389 = vmatprep.subr.mxu0 0.0
  %390 = vmatpush2.msra.mxu0 0.0
  %391 = vmatprep.subr.mxu0 0.0
  %392 = vmatpush2.msra.mxu0 0.0
  %393 = vmatprep.subr.mxu0 0.0
  %394 = vmatpush2.msra.mxu0 0.0
  %395 = vmatprep.subr.mxu0 0.0
  %396 = vmatpush2.msra.mxu0 0.0
  %397 = vmatprep.subr.mxu0 0.0
  %398 = vmatpush2.msra.mxu0 0.0
  %399 = vmatprep.subr.mxu0 0.0
  %400 = vmatpush2.msra.mxu0 0.0
  %401 = vmatprep.subr.mxu0 0.0
  %402 = vmatpush2.msra.mxu0 0.0
  %403 = vmatprep.subr.mxu0 0.0
  %404 = vmatpush2.msra.mxu0 0.0
  %405 = vmatprep.subr.mxu0 0.0
  %406 = vmatpush2.msra.mxu0 0.0
  %407 = vmatprep.subr.mxu0 0.0
  %408 = vmatpush2.msra.mxu0 0.0
  %409 = vmatprep.subr.mxu0 0.0
  %410 = vmatpush2.msra.mxu0 0.0
  %411 = vmatprep.mubr.f32.mxu0 0.0
  %v412 = vand.u32 %v38, 4294901760
  %413 = vmatmul.mubr.f32.gmra.mxu0 %v412
  %v414 = vpop.f32.mrf.mxu0
  %v415 = vadd.f32 %v341, %v414
  %v416 = vpop.f32.mrf.mxu0
  %417 = vdwg.mxu0
  %418 = vmatprep.subr.mxu0 0.0
  %419 = vmatpush1.msra.mxu0 0.0
  %420 = vmatprep.subr.mxu0 0.0
  %421 = vmatpush1.msra.mxu0 0.0
  %422 = vmatprep.subr.mxu0 0.0
  %423 = vmatpush1.msra.mxu0 0.0
  %424 = vmatprep.subr.mxu0 0.0
  %425 = vmatpush1.msra.mxu0 0.0
  %426 = vmatprep.subr.mxu0 0.0
  %427 = vmatpush1.msra.mxu0 0.0
  %428 = vmatprep.subr.mxu0 0.0
  %429 = vmatpush1.msra.mxu0 0.0
  %430 = vmatprep.subr.mxu0 0.0
  %431 = vmatpush1.msra.mxu0 0.0
  %432 = vmatprep.subr.mxu0 0.0
  %433 = vmatpush1.msra.mxu0 0.0
  %434 = vmatprep.subr.mxu0 0.0
  %435 = vmatpush1.msra.mxu0 0.0
  %436 = vmatprep.subr.mxu0 0.0
  %437 = vmatpush1.msra.mxu0 0.0
  %438 = vmatprep.subr.mxu0 0.0
  %439 = vmatpush1.msra.mxu0 0.0
  %440 = vmatprep.subr.mxu0 0.0
  %441 = vmatpush1.msra.mxu0 0.0
  %442 = vmatprep.subr.mxu0 0.0
  %443 = vmatpush1.msra.mxu0 0.0
  %444 = vmatprep.subr.mxu0 0.0
  %445 = vmatpush1.msra.mxu0 0.0
  %446 = vmatprep.subr.mxu0 0.0
  %447 = vmatpush1.msra.mxu0 0.0
  %448 = vmatprep.subr.mxu0 0.0
  %v449 = vand.u32 %v42, 4294901760
  %450 = vmatpush1.msra.mxu0 %v449
  %451 = vmatprep.subr.mxu0 0.0
  %452 = vmatpush2.msra.mxu0 0.0
  %453 = vmatprep.subr.mxu0 0.0
  %454 = vmatpush2.msra.mxu0 0.0
  %455 = vmatprep.subr.mxu0 0.0
  %456 = vmatpush2.msra.mxu0 0.0
  %457 = vmatprep.subr.mxu0 0.0
  %458 = vmatpush2.msra.mxu0 0.0
  %459 = vmatprep.subr.mxu0 0.0
  %460 = vmatpush2.msra.mxu0 0.0
  %461 = vmatprep.subr.mxu0 0.0
  %462 = vmatpush2.msra.mxu0 0.0
  %463 = vmatprep.subr.mxu0 0.0
  %464 = vmatpush2.msra.mxu0 0.0
  %465 = vmatprep.subr.mxu0 0.0
  %466 = vmatpush2.msra.mxu0 0.0
  %467 = vmatprep.subr.mxu0 0.0
  %468 = vmatpush2.msra.mxu0 0.0
  %469 = vmatprep.subr.mxu0 0.0
  %470 = vmatpush2.msra.mxu0 0.0
  %471 = vmatprep.subr.mxu0 0.0
  %472 = vmatpush2.msra.mxu0 0.0
  %473 = vmatprep.subr.mxu0 0.0
  %474 = vmatpush2.msra.mxu0 0.0
  %475 = vmatprep.subr.mxu0 0.0
  %476 = vmatpush2.msra.mxu0 0.0
  %477 = vmatprep.subr.mxu0 0.0
  %478 = vmatpush2.msra.mxu0 0.0
  %479 = vmatprep.subr.mxu0 0.0
  %480 = vmatpush2.msra.mxu0 0.0
  %481 = vmatprep.subr.mxu0 0.0
  %482 = vmatpush2.msra.mxu0 0.0
  %483 = vmatprep.mubr.f32.mxu0 0.0
  %v484 = vand.u32 %v38, 4294901760
  %485 = vmatmul.mubr.f32.gmra.mxu0 %v484
  %v486 = vpop.f32.mrf.mxu0
  %v487 = vadd.f32 %v415, %v486
  %v488 = vpop.f32.mrf.mxu0
  %489 = vdwg.mxu0
  %v490 = vmax.f32 %v487, 0.0
  %v491 = vld [vmem:[%s3] sm:$0x7]
  %v492 = vld [vmem:[%s4] sm:$0x7]
  %494 = vset.pattern.permute.xlu0 0
  %495 = vperm.xlu0 %494, %v492
  %v496 = vpop.permute.xlu0 %495
  %v499 = vsel %vm36, %v491, 0
  %v502 = vsel %vm40, %v490, 0
  %504 = vmatprep.subr.mxu0 0.0
  %505 = vmatpush1.msra.mxu0 0.0
  %506 = vmatprep.subr.mxu0 0.0
  %507 = vmatpush1.msra.mxu0 0.0
  %508 = vmatprep.subr.mxu0 0.0
  %509 = vmatpush1.msra.mxu0 0.0
  %510 = vmatprep.subr.mxu0 0.0
  %511 = vmatpush1.msra.mxu0 0.0
  %512 = vmatprep.subr.mxu0 0.0
  %513 = vmatpush1.msra.mxu0 0.0
  %514 = vmatprep.subr.mxu0 0.0
  %515 = vmatpush1.msra.mxu0 0.0
  %516 = vmatprep.subr.mxu0 0.0
  %517 = vmatpush1.msra.mxu0 0.0
  %518 = vmatprep.subr.mxu0 0.0
  %519 = vmatpush1.msra.mxu0 0.0
  %520 = vmatprep.subr.mxu0 0.0
  %521 = vmatpush1.msra.mxu0 0.0
  %522 = vmatprep.subr.mxu0 0.0
  %523 = vmatpush1.msra.mxu0 0.0
  %524 = vmatprep.subr.mxu0 0.0
  %525 = vmatpush1.msra.mxu0 0.0
  %526 = vmatprep.subr.mxu0 0.0
  %527 = vmatpush1.msra.mxu0 0.0
  %528 = vmatprep.subr.mxu0 0.0
  %529 = vmatpush1.msra.mxu0 0.0
  %530 = vmatprep.subr.mxu0 0.0
  %531 = vmatpush1.msra.mxu0 0.0
  %532 = vmatprep.subr.mxu0 0.0
  %533 = vmatpush1.msra.mxu0 0.0
  %534 = vmatprep.subr.mxu0 0.0
  %v535 = vand.u32 %v502, 4294901760
  %536 = vmatpush1.msra.mxu0 %v535
  %537 = vmatprep.subr.mxu0 0.0
  %538 = vmatpush2.msra.mxu0 0.0
  %539 = vmatprep.subr.mxu0 0.0
  %540 = vmatpush2.msra.mxu0 0.0
  %541 = vmatprep.subr.mxu0 0.0
  %542 = vmatpush2.msra.mxu0 0.0
  %543 = vmatprep.subr.mxu0 0.0
  %544 = vmatpush2.msra.mxu0 0.0
  %545 = vmatprep.subr.mxu0 0.0
  %546 = vmatpush2.msra.mxu0 0.0
  %547 = vmatprep.subr.mxu0 0.0
  %548 = vmatpush2.msra.mxu0 0.0
  %549 = vmatprep.subr.mxu0 0.0
  %550 = vmatpush2.msra.mxu0 0.0
  %551 = vmatprep.subr.mxu0 0.0
  %552 = vmatpush2.msra.mxu0 0.0
  %553 = vmatprep.subr.mxu0 0.0
  %554 = vmatpush2.msra.mxu0 0.0
  %555 = vmatprep.subr.mxu0 0.0
  %556 = vmatpush2.msra.mxu0 0.0
  %557 = vmatprep.subr.mxu0 0.0
  %558 = vmatpush2.msra.mxu0 0.0
  %559 = vmatprep.subr.mxu0 0.0
  %560 = vmatpush2.msra.mxu0 0.0
  %561 = vmatprep.subr.mxu0 0.0
  %562 = vmatpush2.msra.mxu0 0.0
  %563 = vmatprep.subr.mxu0 0.0
  %564 = vmatpush2.msra.mxu0 0.0
  %565 = vmatprep.subr.mxu0 0.0
  %566 = vmatpush2.msra.mxu0 0.0
  %567 = vmatprep.subr.mxu0 0.0
  %568 = vmatpush2.msra.mxu0 0.0
  %569 = vmatprep.mubr.f32.mxu0 0.0
  %v570 = vand.u32 %v499, 4294901760
  %v571 = vsub.f32 %v499, %v570
  %v572 = vand.u32 %v571, 4294901760
  %v573 = vsub.f32 %v571, %v572
  %v574 = vand.u32 %v573, 4294901760
  %575 = vmatmul.mubr.f32.gmra.mxu0 %v574
  %v576 = vpop.f32.mrf.mxu0
  %v577 = vadd.f32 %v496, %v576
  %v578 = vpop.f32.mrf.mxu0
  %579 = vdwg.mxu0
  %580 = vmatprep.subr.mxu0 0.0
  %581 = vmatpush1.msra.mxu0 0.0
  %582 = vmatprep.subr.mxu0 0.0
  %583 = vmatpush1.msra.mxu0 0.0
  %584 = vmatprep.subr.mxu0 0.0
  %585 = vmatpush1.msra.mxu0 0.0
  %586 = vmatprep.subr.mxu0 0.0
  %587 = vmatpush1.msra.mxu0 0.0
  %588 = vmatprep.subr.mxu0 0.0
  %589 = vmatpush1.msra.mxu0 0.0
  %590 = vmatprep.subr.mxu0 0.0
  %591 = vmatpush1.msra.mxu0 0.0
  %592 = vmatprep.subr.mxu0 0.0
  %593 = vmatpush1.msra.mxu0 0.0
  %594 = vmatprep.subr.mxu0 0.0
  %595 = vmatpush1.msra.mxu0 0.0
  %596 = vmatprep.subr.mxu0 0.0
  %597 = vmatpush1.msra.mxu0 0.0
  %598 = vmatprep.subr.mxu0 0.0
  %599 = vmatpush1.msra.mxu0 0.0
  %600 = vmatprep.subr.mxu0 0.0
  %601 = vmatpush1.msra.mxu0 0.0
  %602 = vmatprep.subr.mxu0 0.0
  %603 = vmatpush1.msra.mxu0 0.0
  %604 = vmatprep.subr.mxu0 0.0
  %605 = vmatpush1.msra.mxu0 0.0
  %606 = vmatprep.subr.mxu0 0.0
  %607 = vmatpush1.msra.mxu0 0.0
  %608 = vmatprep.subr.mxu0 0.0
  %609 = vmatpush1.msra.mxu0 0.0
  %610 = vmatprep.subr.mxu0 0.0
  %v611 = vand.u32 %v502, 4294901760
  %v612 = vsub.f32 %v502, %v611
  %v613 = vand.u32 %v612, 4294901760
  %v614 = vsub.f32 %v612, %v613
  %v615 = vand.u32 %v614, 4294901760
  %616 = vmatpush1.msra.mxu0 %v615
  %617 = vmatprep.subr.mxu0 0.0
  %618 = vmatpush2.msra.mxu0 0.0
  %619 = vmatprep.subr.mxu0 0.0
  %620 = vmatpush2.msra.mxu0 0.0
  %621 = vmatprep.subr.mxu0 0.0
  %622 = vmatpush2.msra.mxu0 0.0
  %623 = vmatprep.subr.mxu0 0.0
  %624 = vmatpush2.msra.mxu0 0.0
  %625 = vmatprep.subr.mxu0 0.0
  %626 = vmatpush2.msra.mxu0 0.0
  %627 = vmatprep.subr.mxu0 0.0
  %628 = vmatpush2.msra.mxu0 0.0
  %629 = vmatprep.subr.mxu0 0.0
  %630 = vmatpush2.msra.mxu0 0.0
  %631 = vmatprep.subr.mxu0 0.0
  %632 = vmatpush2.msra.mxu0 0.0
  %633 = vmatprep.subr.mxu0 0.0
  %634 = vmatpush2.msra.mxu0 0.0
  %635 = vmatprep.subr.mxu0 0.0
  %636 = vmatpush2.msra.mxu0 0.0
  %637 = vmatprep.subr.mxu0 0.0
  %638 = vmatpush2.msra.mxu0 0.0
  %639 = vmatprep.subr.mxu0 0.0
  %640 = vmatpush2.msra.mxu0 0.0
  %641 = vmatprep.subr.mxu0 0.0
  %642 = vmatpush2.msra.mxu0 0.0
  %643 = vmatprep.subr.mxu0 0.0
  %644 = vmatpush2.msra.mxu0 0.0
  %645 = vmatprep.subr.mxu0 0.0
  %646 = vmatpush2.msra.mxu0 0.0
  %647 = vmatprep.subr.mxu0 0.0
  %648 = vmatpush2.msra.mxu0 0.0
  %649 = vmatprep.mubr.f32.mxu0 0.0
  %v650 = vand.u32 %v499, 4294901760
  %651 = vmatmul.mubr.f32.gmra.mxu0 %v650
  %v652 = vpop.f32.mrf.mxu0
  %v653 = vadd.f32 %v577, %v652
  %v654 = vpop.f32.mrf.mxu0
  %655 = vdwg.mxu0
  %656 = vmatprep.subr.mxu0 0.0
  %657 = vmatpush1.msra.mxu0 0.0
  %658 = vmatprep.subr.mxu0 0.0
  %659 = vmatpush1.msra.mxu0 0.0
  %660 = vmatprep.subr.mxu0 0.0
  %661 = vmatpush1.msra.mxu0 0.0
  %662 = vmatprep.subr.mxu0 0.0
  %663 = vmatpush1.msra.mxu0 0.0
  %664 = vmatprep.subr.mxu0 0.0
  %665 = vmatpush1.msra.mxu0 0.0
  %666 = vmatprep.subr.mxu0 0.0
  %667 = vmatpush1.msra.mxu0 0.0
  %668 = vmatprep.subr.mxu0 0.0
  %669 = vmatpush1.msra.mxu0 0.0
  %670 = vmatprep.subr.mxu0 0.0
  %671 = vmatpush1.msra.mxu0 0.0
  %672 = vmatprep.subr.mxu0 0.0
  %673 = vmatpush1.msra.mxu0 0.0
  %674 = vmatprep.subr.mxu0 0.0
  %675 = vmatpush1.msra.mxu0 0.0
  %676 = vmatprep.subr.mxu0 0.0
  %677 = vmatpush1.msra.mxu0 0.0
  %678 = vmatprep.subr.mxu0 0.0
  %679 = vmatpush1.msra.mxu0 0.0
  %680 = vmatprep.subr.mxu0 0.0
  %681 = vmatpush1.msra.mxu0 0.0
  %682 = vmatprep.subr.mxu0 0.0
  %683 = vmatpush1.msra.mxu0 0.0
  %684 = vmatprep.subr.mxu0 0.0
  %685 = vmatpush1.msra.mxu0 0.0
  %686 = vmatprep.subr.mxu0 0.0
  %v687 = vand.u32 %v502, 4294901760
  %v688 = vsub.f32 %v502, %v687
  %689 = vmatpush1.msra.mxu0 %v688
  %690 = vmatprep.subr.mxu0 0.0
  %691 = vmatpush2.msra.mxu0 0.0
  %692 = vmatprep.subr.mxu0 0.0
  %693 = vmatpush2.msra.mxu0 0.0
  %694 = vmatprep.subr.mxu0 0.0
  %695 = vmatpush2.msra.mxu0 0.0
  %696 = vmatprep.subr.mxu0 0.0
  %697 = vmatpush2.msra.mxu0 0.0
  %698 = vmatprep.subr.mxu0 0.0
  %699 = vmatpush2.msra.mxu0 0.0
  %700 = vmatprep.subr.mxu0 0.0
  %701 = vmatpush2.msra.mxu0 0.0
  %702 = vmatprep.subr.mxu0 0.0
  %703 = vmatpush2.msra.mxu0 0.0
  %704 = vmatprep.subr.mxu0 0.0
  %705 = vmatpush2.msra.mxu0 0.0
  %706 = vmatprep.subr.mxu0 0.0
  %707 = vmatpush2.msra.mxu0 0.0
  %708 = vmatprep.subr.mxu0 0.0
  %709 = vmatpush2.msra.mxu0 0.0
  %710 = vmatprep.subr.mxu0 0.0
  %711 = vmatpush2.msra.mxu0 0.0
  %712 = vmatprep.subr.mxu0 0.0
  %713 = vmatpush2.msra.mxu0 0.0
  %714 = vmatprep.subr.mxu0 0.0
  %715 = vmatpush2.msra.mxu0 0.0
  %716 = vmatprep.subr.mxu0 0.0
  %717 = vmatpush2.msra.mxu0 0.0
  %718 = vmatprep.subr.mxu0 0.0
  %719 = vmatpush2.msra.mxu0 0.0
  %720 = vmatprep.subr.mxu0 0.0
  %721 = vmatpush2.msra.mxu0 0.0
  %722 = vmatprep.mubr.f32.mxu0 0.0
  %v723 = vand.u32 %v499, 4294901760
  %v724 = vsub.f32 %v499, %v723
  %725 = vmatmul.mubr.f32.gmra.mxu0 %v724
  %v726 = vpop.f32.mrf.mxu0
  %v727 = vadd.f32 %v653, %v726
  %v728 = vpop.f32.mrf.mxu0
  %729 = vdwg.mxu0
  %730 = vmatprep.subr.mxu0 0.0
  %731 = vmatpush1.msra.mxu0 0.0
  %732 = vmatprep.subr.mxu0 0.0
  %733 = vmatpush1.msra.mxu0 0.0
  %734 = vmatprep.subr.mxu0 0.0
  %735 = vmatpush1.msra.mxu0 0.0
  %736 = vmatprep.subr.mxu0 0.0
  %737 = vmatpush1.msra.mxu0 0.0
  %738 = vmatprep.subr.mxu0 0.0
  %739 = vmatpush1.msra.mxu0 0.0
  %740 = vmatprep.subr.mxu0 0.0
  %741 = vmatpush1.msra.mxu0 0.0
  %742 = vmatprep.subr.mxu0 0.0
  %743 = vmatpush1.msra.mxu0 0.0
  %744 = vmatprep.subr.mxu0 0.0
  %745 = vmatpush1.msra.mxu0 0.0
  %746 = vmatprep.subr.mxu0 0.0
  %747 = vmatpush1.msra.mxu0 0.0
  %748 = vmatprep.subr.mxu0 0.0
  %749 = vmatpush1.msra.mxu0 0.0
  %750 = vmatprep.subr.mxu0 0.0
  %751 = vmatpush1.msra.mxu0 0.0
  %752 = vmatprep.subr.mxu0 0.0
  %753 = vmatpush1.msra.mxu0 0.0
  %754 = vmatprep.subr.mxu0 0.0
  %755 = vmatpush1.msra.mxu0 0.0
  %756 = vmatprep.subr.mxu0 0.0
  %757 = vmatpush1.msra.mxu0 0.0
  %758 = vmatprep.subr.mxu0 0.0
  %759 = vmatpush1.msra.mxu0 0.0
  %760 = vmatprep.subr.mxu0 0.0
  %v761 = vand.u32 %v502, 4294901760
  %762 = vmatpush1.msra.mxu0 %v761
  %763 = vmatprep.subr.mxu0 0.0
  %764 = vmatpush2.msra.mxu0 0.0
  %765 = vmatprep.subr.mxu0 0.0
  %766 = vmatpush2.msra.mxu0 0.0
  %767 = vmatprep.subr.mxu0 0.0
  %768 = vmatpush2.msra.mxu0 0.0
  %769 = vmatprep.subr.mxu0 0.0
  %770 = vmatpush2.msra.mxu0 0.0
  %771 = vmatprep.subr.mxu0 0.0
  %772 = vmatpush2.msra.mxu0 0.0
  %773 = vmatprep.subr.mxu0 0.0
  %774 = vmatpush2.msra.mxu0 0.0
  %775 = vmatprep.subr.mxu0 0.0
  %776 = vmatpush2.msra.mxu0 0.0
  %777 = vmatprep.subr.mxu0 0.0
  %778 = vmatpush2.msra.mxu0 0.0
  %779 = vmatprep.subr.mxu0 0.0
  %780 = vmatpush2.msra.mxu0 0.0
  %781 = vmatprep.subr.mxu0 0.0
  %782 = vmatpush2.msra.mxu0 0.0
  %783 = vmatprep.subr.mxu0 0.0
  %784 = vmatpush2.msra.mxu0 0.0
  %785 = vmatprep.subr.mxu0 0.0
  %786 = vmatpush2.msra.mxu0 0.0
  %787 = vmatprep.subr.mxu0 0.0
  %788 = vmatpush2.msra.mxu0 0.0
  %789 = vmatprep.subr.mxu0 0.0
  %790 = vmatpush2.msra.mxu0 0.0
  %791 = vmatprep.subr.mxu0 0.0
  %792 = vmatpush2.msra.mxu0 0.0
  %793 = vmatprep.subr.mxu0 0.0
  %794 = vmatpush2.msra.mxu0 0.0
  %795 = vmatprep.mubr.f32.mxu0 0.0
  %v796 = vand.u32 %v499, 4294901760
  %v797 = vsub.f32 %v499, %v796
  %v798 = vand.u32 %v797, 4294901760
  %799 = vmatmul.mubr.f32.gmra.mxu0 %v798
  %v800 = vpop.f32.mrf.mxu0
  %v801 = vadd.f32 %v727, %v800
  %v802 = vpop.f32.mrf.mxu0
  %803 = vdwg.mxu0
  %804 = vmatprep.subr.mxu0 0.0
  %805 = vmatpush1.msra.mxu0 0.0
  %806 = vmatprep.subr.mxu0 0.0
  %807 = vmatpush1.msra.mxu0 0.0
  %808 = vmatprep.subr.mxu0 0.0
  %809 = vmatpush1.msra.mxu0 0.0
  %810 = vmatprep.subr.mxu0 0.0
  %811 = vmatpush1.msra.mxu0 0.0
  %812 = vmatprep.subr.mxu0 0.0
  %813 = vmatpush1.msra.mxu0 0.0
  %814 = vmatprep.subr.mxu0 0.0
  %815 = vmatpush1.msra.mxu0 0.0
  %816 = vmatprep.subr.mxu0 0.0
  %817 = vmatpush1.msra.mxu0 0.0
  %818 = vmatprep.subr.mxu0 0.0
  %819 = vmatpush1.msra.mxu0 0.0
  %820 = vmatprep.subr.mxu0 0.0
  %821 = vmatpush1.msra.mxu0 0.0
  %822 = vmatprep.subr.mxu0 0.0
  %823 = vmatpush1.msra.mxu0 0.0
  %824 = vmatprep.subr.mxu0 0.0
  %825 = vmatpush1.msra.mxu0 0.0
  %826 = vmatprep.subr.mxu0 0.0
  %827 = vmatpush1.msra.mxu0 0.0
  %828 = vmatprep.subr.mxu0 0.0
  %829 = vmatpush1.msra.mxu0 0.0
  %830 = vmatprep.subr.mxu0 0.0
  %831 = vmatpush1.msra.mxu0 0.0
  %832 = vmatprep.subr.mxu0 0.0
  %833 = vmatpush1.msra.mxu0 0.0
  %834 = vmatprep.subr.mxu0 0.0
  %v835 = vand.u32 %v502, 4294901760
  %v836 = vsub.f32 %v502, %v835
  %v837 = vand.u32 %v836, 4294901760
  %838 = vmatpush1.msra.mxu0 %v837
  %839 = vmatprep.subr.mxu0 0.0
  %840 = vmatpush2.msra.mxu0 0.0
  %841 = vmatprep.subr.mxu0 0.0
  %842 = vmatpush2.msra.mxu0 0.0
  %843 = vmatprep.subr.mxu0 0.0
  %844 = vmatpush2.msra.mxu0 0.0
  %845 = vmatprep.subr.mxu0 0.0
  %846 = vmatpush2.msra.mxu0 0.0
  %847 = vmatprep.subr.mxu0 0.0
  %848 = vmatpush2.msra.mxu0 0.0
  %849 = vmatprep.subr.mxu0 0.0
  %850 = vmatpush2.msra.mxu0 0.0
  %851 = vmatprep.subr.mxu0 0.0
  %852 = vmatpush2.msra.mxu0 0.0
  %853 = vmatprep.subr.mxu0 0.0
  %854 = vmatpush2.msra.mxu0 0.0
  %855 = vmatprep.subr.mxu0 0.0
  %856 = vmatpush2.msra.mxu0 0.0
  %857 = vmatprep.subr.mxu0 0.0
  %858 = vmatpush2.msra.mxu0 0.0
  %859 = vmatprep.subr.mxu0 0.0
  %860 = vmatpush2.msra.mxu0 0.0
  %861 = vmatprep.subr.mxu0 0.0
  %862 = vmatpush2.msra.mxu0 0.0
  %863 = vmatprep.subr.mxu0 0.0
  %864 = vmatpush2.msra.mxu0 0.0
  %865 = vmatprep.subr.mxu0 0.0
  %866 = vmatpush2.msra.mxu0 0.0
  %867 = vmatprep.subr.mxu0 0.0
  %868 = vmatpush2.msra.mxu0 0.0
  %869 = vmatprep.subr.mxu0 0.0
  %870 = vmatpush2.msra.mxu0 0.0
  %871 = vmatprep.mubr.f32.mxu0 0.0
  %v872 = vand.u32 %v499, 4294901760
  %873 = vmatmul.mubr.f32.gmra.mxu0 %v872
  %v874 = vpop.f32.mrf.mxu0
  %v875 = vadd.f32 %v801, %v874
  %v876 = vpop.f32.mrf.mxu0
  %877 = vdwg.mxu0
  %878 = vmatprep.subr.mxu0 0.0
  %879 = vmatpush1.msra.mxu0 0.0
  %880 = vmatprep.subr.mxu0 0.0
  %881 = vmatpush1.msra.mxu0 0.0
  %882 = vmatprep.subr.mxu0 0.0
  %883 = vmatpush1.msra.mxu0 0.0
  %884 = vmatprep.subr.mxu0 0.0
  %885 = vmatpush1.msra.mxu0 0.0
  %886 = vmatprep.subr.mxu0 0.0
  %887 = vmatpush1.msra.mxu0 0.0
  %888 = vmatprep.subr.mxu0 0.0
  %889 = vmatpush1.msra.mxu0 0.0
  %890 = vmatprep.subr.mxu0 0.0
  %891 = vmatpush1.msra.mxu0 0.0
  %892 = vmatprep.subr.mxu0 0.0
  %893 = vmatpush1.msra.mxu0 0.0
  %894 = vmatprep.subr.mxu0 0.0
  %895 = vmatpush1.msra.mxu0 0.0
  %896 = vmatprep.subr.mxu0 0.0
  %897 = vmatpush1.msra.mxu0 0.0
  %898 = vmatprep.subr.mxu0 0.0
  %899 = vmatpush1.msra.mxu0 0.0
  %900 = vmatprep.subr.mxu0 0.0
  %901 = vmatpush1.msra.mxu0 0.0
  %902 = vmatprep.subr.mxu0 0.0
  %903 = vmatpush1.msra.mxu0 0.0
  %904 = vmatprep.subr.mxu0 0.0
  %905 = vmatpush1.msra.mxu0 0.0
  %906 = vmatprep.subr.mxu0 0.0
  %907 = vmatpush1.msra.mxu0 0.0
  %908 = vmatprep.subr.mxu0 0.0
  %v909 = vand.u32 %v502, 4294901760
  %910 = vmatpush1.msra.mxu0 %v909
  %911 = vmatprep.subr.mxu0 0.0
  %912 = vmatpush2.msra.mxu0 0.0
  %913 = vmatprep.subr.mxu0 0.0
  %914 = vmatpush2.msra.mxu0 0.0
  %915 = vmatprep.subr.mxu0 0.0
  %916 = vmatpush2.msra.mxu0 0.0
  %917 = vmatprep.subr.mxu0 0.0
  %918 = vmatpush2.msra.mxu0 0.0
  %919 = vmatprep.subr.mxu0 0.0
  %920 = vmatpush2.msra.mxu0 0.0
  %921 = vmatprep.subr.mxu0 0.0
  %922 = vmatpush2.msra.mxu0 0.0
  %923 = vmatprep.subr.mxu0 0.0
  %924 = vmatpush2.msra.mxu0 0.0
  %925 = vmatprep.subr.mxu0 0.0
  %926 = vmatpush2.msra.mxu0 0.0
  %927 = vmatprep.subr.mxu0 0.0
  %928 = vmatpush2.msra.mxu0 0.0
  %929 = vmatprep.subr.mxu0 0.0
  %930 = vmatpush2.msra.mxu0 0.0
  %931 = vmatprep.subr.mxu0 0.0
  %932 = vmatpush2.msra.mxu0 0.0
  %933 = vmatprep.subr.mxu0 0.0
  %934 = vmatpush2.msra.mxu0 0.0
  %935 = vmatprep.subr.mxu0 0.0
  %936 = vmatpush2.msra.mxu0 0.0
  %937 = vmatprep.subr.mxu0 0.0
  %938 = vmatpush2.msra.mxu0 0.0
  %939 = vmatprep.subr.mxu0 0.0
  %940 = vmatpush2.msra.mxu0 0.0
  %941 = vmatprep.subr.mxu0 0.0
  %942 = vmatpush2.msra.mxu0 0.0
  %943 = vmatprep.mubr.f32.mxu0 0.0
  %v944 = vand.u32 %v499, 4294901760
  %945 = vmatmul.mubr.f32.gmra.mxu0 %v944
  %v946 = vpop.f32.mrf.mxu0
  %v947 = vadd.f32 %v875, %v946
  %v948 = vpop.f32.mrf.mxu0
  %949 = vdwg.mxu0
  %v950 = vmax.f32 %v947, 0.0
  %v951 = vld [vmem:[%s5] sm:$0x1]
  %v952 = vld [vmem:[#allocation2] sm:$0x1]
  %954 = vset.pattern.permute.xlu0 0
  %955 = vperm.xlu0 %954, %v952
  %v956 = vpop.permute.xlu0 %955
  %v958 = vlaneseq
  %v959 = vshrl.u32 %v958, 7
  %v960 = vsub.s32 0, %v959
  %v961 = vrot.slane %v956, %v960
  %vm962 = vcmask 23552
  %v964 = vsel %vm962, %v951, 0
  %vm966 = vcmask 1042432
  %v968 = vsel %vm966, %v950, 0
  %970 = vmatprep.subr.mxu0 0.0
  %971 = vmatpush1.msra.mxu0 0.0
  %972 = vmatprep.subr.mxu0 0.0
  %973 = vmatpush1.msra.mxu0 0.0
  %974 = vmatprep.subr.mxu0 0.0
  %975 = vmatpush1.msra.mxu0 0.0
  %976 = vmatprep.subr.mxu0 0.0
  %977 = vmatpush1.msra.mxu0 0.0
  %978 = vmatprep.subr.mxu0 0.0
  %979 = vmatpush1.msra.mxu0 0.0
  %980 = vmatprep.subr.mxu0 0.0
  %981 = vmatpush1.msra.mxu0 0.0
  %982 = vmatprep.subr.mxu0 0.0
  %983 = vmatpush1.msra.mxu0 0.0
  %984 = vmatprep.subr.mxu0 0.0
  %985 = vmatpush1.msra.mxu0 0.0
  %986 = vmatprep.subr.mxu0 0.0
  %987 = vmatpush1.msra.mxu0 0.0
  %988 = vmatprep.subr.mxu0 0.0
  %989 = vmatpush1.msra.mxu0 0.0
  %990 = vmatprep.subr.mxu0 0.0
  %991 = vmatpush1.msra.mxu0 0.0
  %992 = vmatprep.subr.mxu0 0.0
  %993 = vmatpush1.msra.mxu0 0.0
  %994 = vmatprep.subr.mxu0 0.0
  %995 = vmatpush1.msra.mxu0 0.0
  %996 = vmatprep.subr.mxu0 0.0
  %997 = vmatpush1.msra.mxu0 0.0
  %998 = vmatprep.subr.mxu0 0.0
  %999 = vmatpush1.msra.mxu0 0.0
  %1000 = vmatprep.subr.mxu0 0.0
  %v1001 = vand.u32 %v968, 4294901760
  %1002 = vmatpush1.msra.mxu0 %v1001
  %1003 = vmatprep.subr.mxu0 0.0
  %1004 = vmatpush2.msra.mxu0 0.0
  %1005 = vmatprep.subr.mxu0 0.0
  %1006 = vmatpush2.msra.mxu0 0.0
  %1007 = vmatprep.subr.mxu0 0.0
  %1008 = vmatpush2.msra.mxu0 0.0
  %1009 = vmatprep.subr.mxu0 0.0
  %1010 = vmatpush2.msra.mxu0 0.0
  %1011 = vmatprep.subr.mxu0 0.0
  %1012 = vmatpush2.msra.mxu0 0.0
  %1013 = vmatprep.subr.mxu0 0.0
  %1014 = vmatpush2.msra.mxu0 0.0
  %1015 = vmatprep.subr.mxu0 0.0
  %1016 = vmatpush2.msra.mxu0 0.0
  %1017 = vmatprep.subr.mxu0 0.0
  %1018 = vmatpush2.msra.mxu0 0.0
  %1019 = vmatprep.subr.mxu0 0.0
  %1020 = vmatpush2.msra.mxu0 0.0
  %1021 = vmatprep.subr.mxu0 0.0
  %1022 = vmatpush2.msra.mxu0 0.0
  %1023 = vmatprep.subr.mxu0 0.0
  %1024 = vmatpush2.msra.mxu0 0.0
  %1025 = vmatprep.subr.mxu0 0.0
  %1026 = vmatpush2.msra.mxu0 0.0
  %1027 = vmatprep.subr.mxu0 0.0
  %1028 = vmatpush2.msra.mxu0 0.0
  %1029 = vmatprep.subr.mxu0 0.0
  %1030 = vmatpush2.msra.mxu0 0.0
  %1031 = vmatprep.subr.mxu0 0.0
  %1032 = vmatpush2.msra.mxu0 0.0
  %1033 = vmatprep.subr.mxu0 0.0
  %1034 = vmatpush2.msra.mxu0 0.0
  %1035 = vmatprep.mubr.f32.mxu0 0.0
  %v1036 = vand.u32 %v964, 4294901760
  %v1037 = vsub.f32 %v964, %v1036
  %v1038 = vand.u32 %v1037, 4294901760
  %v1039 = vsub.f32 %v1037, %v1038
  %v1040 = vand.u32 %v1039, 4294901760
  %1041 = vmatmul.mubr.f32.gmra.mxu0 %v1040
  %v1042 = vpop.f32.mrf.mxu0
  %v1043 = vadd.f32 %v961, %v1042
  %v1044 = vpop.f32.mrf.mxu0
  %1045 = vdwg.mxu0
  %1046 = vmatprep.subr.mxu0 0.0
  %1047 = vmatpush1.msra.mxu0 0.0
  %1048 = vmatprep.subr.mxu0 0.0
  %1049 = vmatpush1.msra.mxu0 0.0
  %1050 = vmatprep.subr.mxu0 0.0
  %1051 = vmatpush1.msra.mxu0 0.0
  %1052 = vmatprep.subr.mxu0 0.0
  %1053 = vmatpush1.msra.mxu0 0.0
  %1054 = vmatprep.subr.mxu0 0.0
  %1055 = vmatpush1.msra.mxu0 0.0
  %1056 = vmatprep.subr.mxu0 0.0
  %1057 = vmatpush1.msra.mxu0 0.0
  %1058 = vmatprep.subr.mxu0 0.0
  %1059 = vmatpush1.msra.mxu0 0.0
  %1060 = vmatprep.subr.mxu0 0.0
  %1061 = vmatpush1.msra.mxu0 0.0
  %1062 = vmatprep.subr.mxu0 0.0
  %1063 = vmatpush1.msra.mxu0 0.0
  %1064 = vmatprep.subr.mxu0 0.0
  %1065 = vmatpush1.msra.mxu0 0.0
  %1066 = vmatprep.subr.mxu0 0.0
  %1067 = vmatpush1.msra.mxu0 0.0
  %1068 = vmatprep.subr.mxu0 0.0
  %1069 = vmatpush1.msra.mxu0 0.0
  %1070 = vmatprep.subr.mxu0 0.0
  %1071 = vmatpush1.msra.mxu0 0.0
  %1072 = vmatprep.subr.mxu0 0.0
  %1073 = vmatpush1.msra.mxu0 0.0
  %1074 = vmatprep.subr.mxu0 0.0
  %1075 = vmatpush1.msra.mxu0 0.0
  %1076 = vmatprep.subr.mxu0 0.0
  %v1077 = vand.u32 %v968, 4294901760
  %v1078 = vsub.f32 %v968, %v1077
  %v1079 = vand.u32 %v1078, 4294901760
  %v1080 = vsub.f32 %v1078, %v1079
  %v1081 = vand.u32 %v1080, 4294901760
  %1082 = vmatpush1.msra.mxu0 %v1081
  %1083 = vmatprep.subr.mxu0 0.0
  %1084 = vmatpush2.msra.mxu0 0.0
  %1085 = vmatprep.subr.mxu0 0.0
  %1086 = vmatpush2.msra.mxu0 0.0
  %1087 = vmatprep.subr.mxu0 0.0
  %1088 = vmatpush2.msra.mxu0 0.0
  %1089 = vmatprep.subr.mxu0 0.0
  %1090 = vmatpush2.msra.mxu0 0.0
  %1091 = vmatprep.subr.mxu0 0.0
  %1092 = vmatpush2.msra.mxu0 0.0
  %1093 = vmatprep.subr.mxu0 0.0
  %1094 = vmatpush2.msra.mxu0 0.0
  %1095 = vmatprep.subr.mxu0 0.0
  %1096 = vmatpush2.msra.mxu0 0.0
  %1097 = vmatprep.subr.mxu0 0.0
  %1098 = vmatpush2.msra.mxu0 0.0
  %1099 = vmatprep.subr.mxu0 0.0
  %1100 = vmatpush2.msra.mxu0 0.0
  %1101 = vmatprep.subr.mxu0 0.0
  %1102 = vmatpush2.msra.mxu0 0.0
  %1103 = vmatprep.subr.mxu0 0.0
  %1104 = vmatpush2.msra.mxu0 0.0
  %1105 = vmatprep.subr.mxu0 0.0
  %1106 = vmatpush2.msra.mxu0 0.0
  %1107 = vmatprep.subr.mxu0 0.0
  %1108 = vmatpush2.msra.mxu0 0.0
  %1109 = vmatprep.subr.mxu0 0.0
  %1110 = vmatpush2.msra.mxu0 0.0
  %1111 = vmatprep.subr.mxu0 0.0
  %1112 = vmatpush2.msra.mxu0 0.0
  %1113 = vmatprep.subr.mxu0 0.0
  %1114 = vmatpush2.msra.mxu0 0.0
  %1115 = vmatprep.mubr.f32.mxu0 0.0
  %v1116 = vand.u32 %v964, 4294901760
  %1117 = vmatmul.mubr.f32.gmra.mxu0 %v1116
  %v1118 = vpop.f32.mrf.mxu0
  %v1119 = vadd.f32 %v1043, %v1118
  %v1120 = vpop.f32.mrf.mxu0
  %1121 = vdwg.mxu0
  %1122 = vmatprep.subr.mxu0 0.0
  %1123 = vmatpush1.msra.mxu0 0.0
  %1124 = vmatprep.subr.mxu0 0.0
  %1125 = vmatpush1.msra.mxu0 0.0
  %1126 = vmatprep.subr.mxu0 0.0
  %1127 = vmatpush1.msra.mxu0 0.0
  %1128 = vmatprep.subr.mxu0 0.0
  %1129 = vmatpush1.msra.mxu0 0.0
  %1130 = vmatprep.subr.mxu0 0.0
  %1131 = vmatpush1.msra.mxu0 0.0
  %1132 = vmatprep.subr.mxu0 0.0
  %1133 = vmatpush1.msra.mxu0 0.0
  %1134 = vmatprep.subr.mxu0 0.0
  %1135 = vmatpush1.msra.mxu0 0.0
  %1136 = vmatprep.subr.mxu0 0.0
  %1137 = vmatpush1.msra.mxu0 0.0
  %1138 = vmatprep.subr.mxu0 0.0
  %1139 = vmatpush1.msra.mxu0 0.0
  %1140 = vmatprep.subr.mxu0 0.0
  %1141 = vmatpush1.msra.mxu0 0.0
  %1142 = vmatprep.subr.mxu0 0.0
  %1143 = vmatpush1.msra.mxu0 0.0
  %1144 = vmatprep.subr.mxu0 0.0
  %1145 = vmatpush1.msra.mxu0 0.0
  %1146 = vmatprep.subr.mxu0 0.0
  %1147 = vmatpush1.msra.mxu0 0.0
  %1148 = vmatprep.subr.mxu0 0.0
  %1149 = vmatpush1.msra.mxu0 0.0
  %1150 = vmatprep.subr.mxu0 0.0
  %1151 = vmatpush1.msra.mxu0 0.0
  %1152 = vmatprep.subr.mxu0 0.0
  %v1153 = vand.u32 %v968, 4294901760
  %v1154 = vsub.f32 %v968, %v1153
  %1155 = vmatpush1.msra.mxu0 %v1154
  %1156 = vmatprep.subr.mxu0 0.0
  %1157 = vmatpush2.msra.mxu0 0.0
  %1158 = vmatprep.subr.mxu0 0.0
  %1159 = vmatpush2.msra.mxu0 0.0
  %1160 = vmatprep.subr.mxu0 0.0
  %1161 = vmatpush2.msra.mxu0 0.0
  %1162 = vmatprep.subr.mxu0 0.0
  %1163 = vmatpush2.msra.mxu0 0.0
  %1164 = vmatprep.subr.mxu0 0.0
  %1165 = vmatpush2.msra.mxu0 0.0
  %1166 = vmatprep.subr.mxu0 0.0
  %1167 = vmatpush2.msra.mxu0 0.0
  %1168 = vmatprep.subr.mxu0 0.0
  %1169 = vmatpush2.msra.mxu0 0.0
  %1170 = vmatprep.subr.mxu0 0.0
  %1171 = vmatpush2.msra.mxu0 0.0
  %1172 = vmatprep.subr.mxu0 0.0
  %1173 = vmatpush2.msra.mxu0 0.0
  %1174 = vmatprep.subr.mxu0 0.0
  %1175 = vmatpush2.msra.mxu0 0.0
  %1176 = vmatprep.subr.mxu0 0.0
  %1177 = vmatpush2.msra.mxu0 0.0
  %1178 = vmatprep.subr.mxu0 0.0
  %1179 = vmatpush2.msra.mxu0 0.0
  %1180 = vmatprep.subr.mxu0 0.0
  %1181 = vmatpush2.msra.mxu0 0.0
  %1182 = vmatprep.subr.mxu0 0.0
  %1183 = vmatpush2.msra.mxu0 0.0
  %1184 = vmatprep.subr.mxu0 0.0
  %1185 = vmatpush2.msra.mxu0 0.0
  %1186 = vmatprep.subr.mxu0 0.0
  %1187 = vmatpush2.msra.mxu0 0.0
  %1188 = vmatprep.mubr.f32.mxu0 0.0
  %v1189 = vand.u32 %v964, 4294901760
  %v1190 = vsub.f32 %v964, %v1189
  %1191 = vmatmul.mubr.f32.gmra.mxu0 %v1190
  %v1192 = vpop.f32.mrf.mxu0
  %v1193 = vadd.f32 %v1119, %v1192
  %v1194 = vpop.f32.mrf.mxu0
  %1195 = vdwg.mxu0
  %1196 = vmatprep.subr.mxu0 0.0
  %1197 = vmatpush1.msra.mxu0 0.0
  %1198 = vmatprep.subr.mxu0 0.0
  %1199 = vmatpush1.msra.mxu0 0.0
  %1200 = vmatprep.subr.mxu0 0.0
  %1201 = vmatpush1.msra.mxu0 0.0
  %1202 = vmatprep.subr.mxu0 0.0
  %1203 = vmatpush1.msra.mxu0 0.0
  %1204 = vmatprep.subr.mxu0 0.0
  %1205 = vmatpush1.msra.mxu0 0.0
  %1206 = vmatprep.subr.mxu0 0.0
  %1207 = vmatpush1.msra.mxu0 0.0
  %1208 = vmatprep.subr.mxu0 0.0
  %1209 = vmatpush1.msra.mxu0 0.0
  %1210 = vmatprep.subr.mxu0 0.0
  %1211 = vmatpush1.msra.mxu0 0.0
  %1212 = vmatprep.subr.mxu0 0.0
  %1213 = vmatpush1.msra.mxu0 0.0
  %1214 = vmatprep.subr.mxu0 0.0
  %1215 = vmatpush1.msra.mxu0 0.0
  %1216 = vmatprep.subr.mxu0 0.0
  %1217 = vmatpush1.msra.mxu0 0.0
  %1218 = vmatprep.subr.mxu0 0.0
  %1219 = vmatpush1.msra.mxu0 0.0
  %1220 = vmatprep.subr.mxu0 0.0
  %1221 = vmatpush1.msra.mxu0 0.0
  %1222 = vmatprep.subr.mxu0 0.0
  %1223 = vmatpush1.msra.mxu0 0.0
  %1224 = vmatprep.subr.mxu0 0.0
  %1225 = vmatpush1.msra.mxu0 0.0
  %1226 = vmatprep.subr.mxu0 0.0
  %v1227 = vand.u32 %v968, 4294901760
  %1228 = vmatpush1.msra.mxu0 %v1227
  %1229 = vmatprep.subr.mxu0 0.0
  %1230 = vmatpush2.msra.mxu0 0.0
  %1231 = vmatprep.subr.mxu0 0.0
  %1232 = vmatpush2.msra.mxu0 0.0
  %1233 = vmatprep.subr.mxu0 0.0
  %1234 = vmatpush2.msra.mxu0 0.0
  %1235 = vmatprep.subr.mxu0 0.0
  %1236 = vmatpush2.msra.mxu0 0.0
  %1237 = vmatprep.subr.mxu0 0.0
  %1238 = vmatpush2.msra.mxu0 0.0
  %1239 = vmatprep.subr.mxu0 0.0
  %1240 = vmatpush2.msra.mxu0 0.0
  %1241 = vmatprep.subr.mxu0 0.0
  %1242 = vmatpush2.msra.mxu0 0.0
  %1243 = vmatprep.subr.mxu0 0.0
  %1244 = vmatpush2.msra.mxu0 0.0
  %1245 = vmatprep.subr.mxu0 0.0
  %1246 = vmatpush2.msra.mxu0 0.0
  %1247 = vmatprep.subr.mxu0 0.0
  %1248 = vmatpush2.msra.mxu0 0.0
  %1249 = vmatprep.subr.mxu0 0.0
  %1250 = vmatpush2.msra.mxu0 0.0
  %1251 = vmatprep.subr.mxu0 0.0
  %1252 = vmatpush2.msra.mxu0 0.0
  %1253 = vmatprep.subr.mxu0 0.0
  %1254 = vmatpush2.msra.mxu0 0.0
  %1255 = vmatprep.subr.mxu0 0.0
  %1256 = vmatpush2.msra.mxu0 0.0
  %1257 = vmatprep.subr.mxu0 0.0
  %1258 = vmatpush2.msra.mxu0 0.0
  %1259 = vmatprep.subr.mxu0 0.0
  %1260 = vmatpush2.msra.mxu0 0.0
  %1261 = vmatprep.mubr.f32.mxu0 0.0
  %v1262 = vand.u32 %v964, 4294901760
  %v1263 = vsub.f32 %v964, %v1262
  %v1264 = vand.u32 %v1263, 4294901760
  %1265 = vmatmul.mubr.f32.gmra.mxu0 %v1264
  %v1266 = vpop.f32.mrf.mxu0
  %v1267 = vadd.f32 %v1193, %v1266
  %v1268 = vpop.f32.mrf.mxu0
  %1269 = vdwg.mxu0
  %1270 = vmatprep.subr.mxu0 0.0
  %1271 = vmatpush1.msra.mxu0 0.0
  %1272 = vmatprep.subr.mxu0 0.0
  %1273 = vmatpush1.msra.mxu0 0.0
  %1274 = vmatprep.subr.mxu0 0.0
  %1275 = vmatpush1.msra.mxu0 0.0
  %1276 = vmatprep.subr.mxu0 0.0
  %1277 = vmatpush1.msra.mxu0 0.0
  %1278 = vmatprep.subr.mxu0 0.0
  %1279 = vmatpush1.msra.mxu0 0.0
  %1280 = vmatprep.subr.mxu0 0.0
  %1281 = vmatpush1.msra.mxu0 0.0
  %1282 = vmatprep.subr.mxu0 0.0
  %1283 = vmatpush1.msra.mxu0 0.0
  %1284 = vmatprep.subr.mxu0 0.0
  %1285 = vmatpush1.msra.mxu0 0.0
  %1286 = vmatprep.subr.mxu0 0.0
  %1287 = vmatpush1.msra.mxu0 0.0
  %1288 = vmatprep.subr.mxu0 0.0
  %1289 = vmatpush1.msra.mxu0 0.0
  %1290 = vmatprep.subr.mxu0 0.0
  %1291 = vmatpush1.msra.mxu0 0.0
  %1292 = vmatprep.subr.mxu0 0.0
  %1293 = vmatpush1.msra.mxu0 0.0
  %1294 = vmatprep.subr.mxu0 0.0
  %1295 = vmatpush1.msra.mxu0 0.0
  %1296 = vmatprep.subr.mxu0 0.0
  %1297 = vmatpush1.msra.mxu0 0.0
  %1298 = vmatprep.subr.mxu0 0.0
  %1299 = vmatpush1.msra.mxu0 0.0
  %1300 = vmatprep.subr.mxu0 0.0
  %v1301 = vand.u32 %v968, 4294901760
  %v1302 = vsub.f32 %v968, %v1301
  %v1303 = vand.u32 %v1302, 4294901760
  %1304 = vmatpush1.msra.mxu0 %v1303
  %1305 = vmatprep.subr.mxu0 0.0
  %1306 = vmatpush2.msra.mxu0 0.0
  %1307 = vmatprep.subr.mxu0 0.0
  %1308 = vmatpush2.msra.mxu0 0.0
  %1309 = vmatprep.subr.mxu0 0.0
  %1310 = vmatpush2.msra.mxu0 0.0
  %1311 = vmatprep.subr.mxu0 0.0
  %1312 = vmatpush2.msra.mxu0 0.0
  %1313 = vmatprep.subr.mxu0 0.0
  %1314 = vmatpush2.msra.mxu0 0.0
  %1315 = vmatprep.subr.mxu0 0.0
  %1316 = vmatpush2.msra.mxu0 0.0
  %1317 = vmatprep.subr.mxu0 0.0
  %1318 = vmatpush2.msra.mxu0 0.0
  %1319 = vmatprep.subr.mxu0 0.0
  %1320 = vmatpush2.msra.mxu0 0.0
  %1321 = vmatprep.subr.mxu0 0.0
  %1322 = vmatpush2.msra.mxu0 0.0
  %1323 = vmatprep.subr.mxu0 0.0
  %1324 = vmatpush2.msra.mxu0 0.0
  %1325 = vmatprep.subr.mxu0 0.0
  %1326 = vmatpush2.msra.mxu0 0.0
  %1327 = vmatprep.subr.mxu0 0.0
  %1328 = vmatpush2.msra.mxu0 0.0
  %1329 = vmatprep.subr.mxu0 0.0
  %1330 = vmatpush2.msra.mxu0 0.0
  %1331 = vmatprep.subr.mxu0 0.0
  %1332 = vmatpush2.msra.mxu0 0.0
  %1333 = vmatprep.subr.mxu0 0.0
  %1334 = vmatpush2.msra.mxu0 0.0
  %1335 = vmatprep.subr.mxu0 0.0
  %1336 = vmatpush2.msra.mxu0 0.0
  %1337 = vmatprep.mubr.f32.mxu0 0.0
  %v1338 = vand.u32 %v964, 4294901760
  %1339 = vmatmul.mubr.f32.gmra.mxu0 %v1338
  %v1340 = vpop.f32.mrf.mxu0
  %v1341 = vadd.f32 %v1267, %v1340
  %v1342 = vpop.f32.mrf.mxu0
  %1343 = vdwg.mxu0
  %1344 = vmatprep.subr.mxu0 0.0
  %1345 = vmatpush1.msra.mxu0 0.0
  %1346 = vmatprep.subr.mxu0 0.0
  %1347 = vmatpush1.msra.mxu0 0.0
  %1348 = vmatprep.subr.mxu0 0.0
  %1349 = vmatpush1.msra.mxu0 0.0
  %1350 = vmatprep.subr.mxu0 0.0
  %1351 = vmatpush1.msra.mxu0 0.0
  %1352 = vmatprep.subr.mxu0 0.0
  %1353 = vmatpush1.msra.mxu0 0.0
  %1354 = vmatprep.subr.mxu0 0.0
  %1355 = vmatpush1.msra.mxu0 0.0
  %1356 = vmatprep.subr.mxu0 0.0
  %1357 = vmatpush1.msra.mxu0 0.0
  %1358 = vmatprep.subr.mxu0 0.0
  %1359 = vmatpush1.msra.mxu0 0.0
  %1360 = vmatprep.subr.mxu0 0.0
  %1361 = vmatpush1.msra.mxu0 0.0
  %1362 = vmatprep.subr.mxu0 0.0
  %1363 = vmatpush1.msra.mxu0 0.0
  %1364 = vmatprep.subr.mxu0 0.0
  %1365 = vmatpush1.msra.mxu0 0.0
  %1366 = vmatprep.subr.mxu0 0.0
  %1367 = vmatpush1.msra.mxu0 0.0
  %1368 = vmatprep.subr.mxu0 0.0
  %1369 = vmatpush1.msra.mxu0 0.0
  %1370 = vmatprep.subr.mxu0 0.0
  %1371 = vmatpush1.msra.mxu0 0.0
  %1372 = vmatprep.subr.mxu0 0.0
  %1373 = vmatpush1.msra.mxu0 0.0
  %1374 = vmatprep.subr.mxu0 0.0
  %v1375 = vand.u32 %v968, 4294901760
  %1376 = vmatpush1.msra.mxu0 %v1375
  %1377 = vmatprep.subr.mxu0 0.0
  %1378 = vmatpush2.msra.mxu0 0.0
  %1379 = vmatprep.subr.mxu0 0.0
  %1380 = vmatpush2.msra.mxu0 0.0
  %1381 = vmatprep.subr.mxu0 0.0
  %1382 = vmatpush2.msra.mxu0 0.0
  %1383 = vmatprep.subr.mxu0 0.0
  %1384 = vmatpush2.msra.mxu0 0.0
  %1385 = vmatprep.subr.mxu0 0.0
  %1386 = vmatpush2.msra.mxu0 0.0
  %1387 = vmatprep.subr.mxu0 0.0
  %1388 = vmatpush2.msra.mxu0 0.0
  %1389 = vmatprep.subr.mxu0 0.0
  %1390 = vmatpush2.msra.mxu0 0.0
  %1391 = vmatprep.subr.mxu0 0.0
  %1392 = vmatpush2.msra.mxu0 0.0
  %1393 = vmatprep.subr.mxu0 0.0
  %1394 = vmatpush2.msra.mxu0 0.0
  %1395 = vmatprep.subr.mxu0 0.0
  %1396 = vmatpush2.msra.mxu0 0.0
  %1397 = vmatprep.subr.mxu0 0.0
  %1398 = vmatpush2.msra.mxu0 0.0
  %1399 = vmatprep.subr.mxu0 0.0
  %1400 = vmatpush2.msra.mxu0 0.0
  %1401 = vmatprep.subr.mxu0 0.0
  %1402 = vmatpush2.msra.mxu0 0.0
  %1403 = vmatprep.subr.mxu0 0.0
  %1404 = vmatpush2.msra.mxu0 0.0
  %1405 = vmatprep.subr.mxu0 0.0
  %1406 = vmatpush2.msra.mxu0 0.0
  %1407 = vmatprep.subr.mxu0 0.0
  %1408 = vmatpush2.msra.mxu0 0.0
  %1409 = vmatprep.mubr.f32.mxu0 0.0
  %v1410 = vand.u32 %v964, 4294901760
  %1411 = vmatmul.mubr.f32.gmra.mxu0 %v1410
  %v1412 = vpop.f32.mrf.mxu0
  %v1413 = vadd.f32 %v1341, %v1412
  %v1414 = vpop.f32.mrf.mxu0
  %1415 = vdwg.mxu0
  %v1416 = vmul.f32 %v1413, 0.5
  %v1417 = vtanh.pop %v1416
  %v1418 = vmul.f32 %v1417, 0.5
  %v1419 = vadd.f32 %v1418, 0.5
  %1420 = vst [vmem:[%s7] sm:$0x1] %v1419
  // Predicated region
  $region30: #{classifier_forward.1} parent=0 // pred_check
    _
  $region31: #{classifier_forward.1} parent=0 // pred_check_branch
    %1422 = sbr.rel (0) target = $region33
  $region32: #{classifier_forward.1} parent=0 // pred_region
    _
  $region33: #{classifier_forward.1} parent=0 // pred_fallthru
    _
  // Predicated region
  $region34: #{classifier_forward.1} parent=0 // pred_check
    _
  $region35: #{classifier_forward.1} parent=0 // pred_check_branch
    %1424 = sbr.rel (0) target = $region37
  $region36: #{classifier_forward.1} parent=0 // pred_region
    _
  $region37: #{classifier_forward.1} parent=0 // pred_fallthru
    _

</llo_original>
